<compile_context>
chip_gen: v7x
topology: tpu7x:2x2x1
jax: 0.10.0
libtpu: 0.0.40
codegen_flags: <defaults>
</compile_context>

<pallas_src>
import functools

import jax
import jax.numpy as jnp
from jax.experimental import pallas as pl
from jax.experimental.pallas import tpu as pltpu


def _elu(x):
    # ELU(alpha=1): x for x > 0, exp(x)-1 for x <= 0.  Clamp before exp so the
    # unselected branch never overflows.
    return jnp.where(x > 0.0, x, jnp.exp(jnp.minimum(x, 0.0)) - 1.0)


def _fused_conv_body_kernel(p1_ref, w1_ref, b1_ref, w2_ref, b2_ref, o_ref, *,
                            sub_b, n_sub, m1p, m2p, wp, cout):
    # p1_ref : (tile_b*M1p, 9*Cin)  bf16  conv1 im2col patches (padded grid)
    # w1_ref : (9*Cin, Cout)        bf16  rows ordered (kh, kw, cin)
    # b1_ref : (1, Cout)            f32
    # w2_ref : (9*Cout, Cout)       bf16  rows ordered (kh, kw, cin)
    # b2_ref : (1, Cout)            f32
    # o_ref  : (tile_b*M2p, Cout)   f32   conv2 output on the padded grid
    w1 = w1_ref[...]
    w2 = w2_ref[...]
    b1 = b1_ref[...]
    b2 = b2_ref[...]
    rows1 = sub_b * m1p
    rows2 = sub_b * m2p

    def body(sb, carry):
        r1 = pl.multiple_of(sb * rows1, rows1)
        p1 = p1_ref[pl.ds(r1, rows1), :]                        # (rows1, 9*Cin)

        # ---- conv1: one batched MXU matmul + bias + ELU (f32 epilogue) ------
        acc1 = jnp.dot(p1, w1, preferred_element_type=jnp.float32)
        y1 = _elu(acc1 + b1)                                    # (rows1, Cout) f32
        y1 = y1.reshape(sub_b, m1p, cout)                       # 8-aligned split

        # ---- conv2: 9 flat-row tap windows -> one K=9*Cout MXU matmul -------
        # Tap (kh, kw) of output (h2, w2) reads conv1 position (h2+kh, w2+kw),
        # i.e. flat row (kh*Wp + kw) + (h2*Wp + w2): a single contiguous
        # window of length M2p per sample (padding guarantees it stays in
        # range; the padded columns w2 >= Wo2 are discarded by the wrapper).
        slabs = []
        for kh in range(3):
            for kw in range(3):
                s = kh * wp + kw
                slabs.append(y1[:, s:s + m2p, :])               # (sub_b, M2p, Cout)
        cols = jnp.concatenate(slabs, axis=-1)                  # (sub_b, M2p, 9*Cout)
        cols = cols.reshape(rows2, 9 * cout).astype(jnp.bfloat16)
        acc2 = jnp.dot(cols, w2, preferred_element_type=jnp.float32)

        r2 = pl.multiple_of(sb * rows2, rows2)
        o_ref[pl.ds(r2, rows2), :] = _elu(acc2 + b2).astype(o_ref.dtype)
        return carry

    jax.lax.fori_loop(0, n_sub, body, 0)


def _im2col(x_nhwc, k, stride):
    """(kh, kw, cin)-ordered valid-conv patches. Pure reshaping glue (XLA)."""
    B, H, W, C = x_nhwc.shape
    Ho = (H - k) // stride + 1
    Wo = (W - k) // stride + 1
    cols = []
    for kh in range(k):
        for kw in range(k):
            cols.append(x_nhwc[:, kh:kh + stride * (Ho - 1) + 1:stride,
                               kw:kw + stride * (Wo - 1) + 1:stride, :])
    return jnp.concatenate(cols, axis=-1), Ho, Wo    # (B, Ho, Wo, k*k*C)


def _round_up(n, m):
    return ((n + m - 1) // m) * m


def init_params(key, in_channels=4):
    # layer_init in DeepRL is orthogonal init + zero bias; forward semantics do
    # not depend on the init, so a scaled normal is used here.
    k1, k2 = jax.random.split(key, 2)
    w1 = jax.random.normal(k1, (32, in_channels, 3, 3), jnp.float32) * 0.1
    b1 = jnp.zeros((32,), jnp.float32)
    w2 = jax.random.normal(k2, (32, 32, 3, 3), jnp.float32) * 0.1
    b2 = jnp.zeros((32,), jnp.float32)
    return {"w1": w1, "b1": b1, "w2": w2, "b2": b2}


@jax.jit
def ddpg_conv_body_forward(params, x_nchw):
    B, Cin, H, W = x_nchw.shape
    Cout = params["w1"].shape[0]

    # NCHW (PyTorch) -> NHWC (channels on the lane axis).
    x = jnp.transpose(x_nchw, (0, 2, 3, 1)).astype(jnp.float32)

    # conv1 im2col in XLA (fused into the kernel input copy).
    patches, Ho1, Wo1 = _im2col(x, 3, 2)               # (B, Ho1, Wo1, 9*Cin)
    Ho2, Wo2 = Ho1 - 2, Wo1 - 2
    Kd1 = 9 * Cin

    # Pad the conv1 output grid: W to a multiple of 8 (aligned reshapes /
    # aligned tap windows) and H by one extra row (so the last tap window
    # never runs out of range).  Padded positions never reach valid outputs.
    Wp = _round_up(Wo1, 8)
    Ho1p = Ho1 + 1
    M1p = Ho1p * Wp                                    # conv1 rows per sample
    M2p = Ho2 * Wp                                     # conv2 rows per sample

    # Batch tiling: big tiles (multiple of 8, up to 128 samples) capped so the
    # double-buffered in/out blocks stay within a few MiB of VMEM.
    bytes_per_sample = M1p * Kd1 * 2 + M2p * Cout * 4
    vmem_cap_tile = max(8, ((8 * 1024 * 1024) // (2 * bytes_per_sample)) // 8 * 8)
    tile_b = min(128, vmem_cap_tile, _round_up(B, 8))
    Bp = _round_up(B, tile_b)
    # In-kernel sub-block size: keep per-iteration vector values small.
    sub_b = 8
    while sub_b > 1 and sub_b * M2p * 9 * Cout * 4 > 1_500_000:
        sub_b //= 2
    n_sub = tile_b // sub_b

    patches = jnp.pad(patches,
                      ((0, Bp - B), (0, Ho1p - Ho1), (0, Wp - Wo1), (0, 0)))
    p1 = patches.reshape(Bp * M1p, Kd1).astype(jnp.bfloat16)

    # PyTorch (Cout, Cin, KH, KW) -> (KH, KW, Cin, Cout): matches im2col order.
    w1 = jnp.transpose(params["w1"], (2, 3, 1, 0)).reshape(Kd1, Cout)
    w1 = w1.astype(jnp.bfloat16)
    b1 = params["b1"].reshape(1, Cout).astype(jnp.float32)
    w2 = jnp.transpose(params["w2"], (2, 3, 1, 0)).reshape(9 * Cout, Cout)
    w2 = w2.astype(jnp.bfloat16)
    b2 = params["b2"].reshape(1, Cout).astype(jnp.float32)

    kernel = functools.partial(
        _fused_conv_body_kernel,
        sub_b=sub_b, n_sub=n_sub, m1p=M1p, m2p=M2p, wp=Wp, cout=Cout)

    out = pl.pallas_call(
        kernel,
        out_shape=jax.ShapeDtypeStruct((Bp * M2p, Cout), jnp.float32),
        grid=(Bp // tile_b,),
        in_specs=[
            pl.BlockSpec((tile_b * M1p, Kd1), lambda i: (i, 0)),   # patches
            pl.BlockSpec((Kd1, Cout), lambda i: (0, 0)),           # w1
            pl.BlockSpec((1, Cout), lambda i: (0, 0)),             # b1
            pl.BlockSpec((9 * Cout, Cout), lambda i: (0, 0)),      # w2
            pl.BlockSpec((1, Cout), lambda i: (0, 0)),             # b2
        ],
        out_specs=pl.BlockSpec((tile_b * M2p, Cout), lambda i: (i, 0)),
        compiler_params=pltpu.CompilerParams(
            dimension_semantics=("parallel",),
            vmem_limit_bytes=32 * 1024 * 1024),
    )(p1, w1, b1, w2, b2)

    # Drop padded batch samples / padded output columns, then match PyTorch's
    # y.view(B, -1): flatten in NCHW (C, H, W) order.
    y = out.reshape(Bp, Ho2, Wp, Cout)[:B, :, :Wo2, :]
    y = jnp.transpose(y, (0, 3, 1, 2))
    return y.reshape(B, -1)


def _reference_forward(params, x_nchw):
    """Pure-JAX (f32) reference of the PyTorch module's forward."""
    y = jax.lax.conv_general_dilated(
        x_nchw.astype(jnp.float32), params["w1"], window_strides=(2, 2),
        padding="VALID", dimension_numbers=("NCHW", "OIHW", "NCHW"))
    y = jax.nn.elu(y + params["b1"][None, :, None, None])
    y = jax.lax.conv_general_dilated(
        y, params["w2"], window_strides=(1, 1),
        padding="VALID", dimension_numbers=("NCHW", "OIHW", "NCHW"))
    y = jax.nn.elu(y + params["b2"][None, :, None, None])
    return y.reshape(y.shape[0], -1)


if __name__ == "__main__":
    key = jax.random.PRNGKey(0)
    k_param, k_data = jax.random.split(key)

    B, C, H, W = 2, 4, 16, 16          # small synthetic shapes
    x = jax.random.normal(k_data, (B, C, H, W), jnp.float32)
    params = init_params(k_param, in_channels=C)

    y = ddpg_conv_body_forward(params, x)
    y = jax.block_until_ready(y)

    # conv1: (16-3)//2+1 = 7 ; conv2: 7-3+1 = 5 ; flatten -> 32*5*5 = 800
    assert y.shape == (B, 32 * 5 * 5), y.shape
    assert bool(jnp.all(jnp.isfinite(y)))

    # bf16-matmul-input / f32-accumulate kernel vs. f32 reference.
    ref = _reference_forward(params, x)
    max_err = float(jnp.max(jnp.abs(y - ref)))
    assert max_err < 0.1, f"max abs error vs reference: {max_err}"

    print("KERNEL_OK")
</pallas_src>

<mosaic_0001>
module attributes {stable_mosaic.version = 11 : i64} {
  func.func @_fused_conv_body_kernel(%arg0: i32, %arg1: memref<512x36xbf16, #tpu.memory_space<vmem>>, %arg2: memref<36x32xbf16, #tpu.memory_space<vmem>>, %arg3: memref<1x32xf32, #tpu.memory_space<vmem>>, %arg4: memref<288x32xbf16, #tpu.memory_space<vmem>>, %arg5: memref<1x32xf32, #tpu.memory_space<vmem>>, %arg6: memref<320x32xf32, #tpu.memory_space<vmem>>) attributes {dimension_semantics = [#tpu.dimension_semantics<parallel>], iteration_bounds = array<i64: 1>, scalar_prefetch = 0 : i64, scratch_operands = 0 : i64, tpu.core_type = #tpu.core_type<tc>, window_params = [{transform_indices = @transform_0, window_bounds = array<i64: 512, 36>}, {pipeline_mode = #tpu.pipeline_mode<synchronous>, transform_indices = @transform_1, window_bounds = array<i64: 36, 32>}, {pipeline_mode = #tpu.pipeline_mode<synchronous>, transform_indices = @transform_2, window_bounds = array<i64: 1, 32>}, {pipeline_mode = #tpu.pipeline_mode<synchronous>, transform_indices = @transform_3, window_bounds = array<i64: 288, 32>}, {pipeline_mode = #tpu.pipeline_mode<synchronous>, transform_indices = @transform_4, window_bounds = array<i64: 1, 32>}, {transform_indices = @transform_5, window_bounds = array<i64: 320, 32>}]} {
    %c0 = arith.constant 0 : index
    %c0_0 = arith.constant 0 : index
    %0 = vector.load %arg2[%c0, %c0_0] : memref<36x32xbf16, #tpu.memory_space<vmem>>, vector<36x32xbf16>
    %c0_1 = arith.constant 0 : index
    %c0_2 = arith.constant 0 : index
    %1 = vector.load %arg4[%c0_1, %c0_2] : memref<288x32xbf16, #tpu.memory_space<vmem>>, vector<288x32xbf16>
    %c0_3 = arith.constant 0 : index
    %c0_4 = arith.constant 0 : index
    %2 = vector.load %arg3[%c0_3, %c0_4] : memref<1x32xf32, #tpu.memory_space<vmem>>, vector<1x32xf32>
    %c0_5 = arith.constant 0 : index
    %c0_6 = arith.constant 0 : index
    %3 = vector.load %arg5[%c0_5, %c0_6] : memref<1x32xf32, #tpu.memory_space<vmem>>, vector<1x32xf32>
    %c0_i32 = arith.constant 0 : i32
    %c512_i32 = arith.constant 512 : i32
    %4 = arith.muli %c0_i32, %c512_i32 : i32
    %5 = tpu.assume_multiple %4, 512 : i32
    %6 = arith.index_cast %5 : i32 to index
    %c0_7 = arith.constant 0 : index
    %7 = vector.load %arg1[%6, %c0_7] : memref<512x36xbf16, #tpu.memory_space<vmem>>, vector<512x36xbf16>
    %cst = arith.constant dense<0.000000e+00> : vector<512x32xf32>
    %8 = tpu.matmul %7, %0, %cst {dimension_numbers = #tpu.dot_dimension_numbers<[1], [0], [0], [1], [0, 0, 1, 1], [], []>} : vector<512x36xbf16>, vector<36x32xbf16>, vector<512x32xf32> -> vector<512x32xf32>
    %9 = vector.broadcast %2 : vector<1x32xf32> to vector<512x32xf32>
    %10 = arith.addf %8, %9 : vector<512x32xf32>
    %cst_8 = arith.constant 0.000000e+00 : f32
    %11 = vector.broadcast %cst_8 : f32 to vector<512x32xf32>
    %12 = arith.cmpf ogt, %10, %11 : vector<512x32xf32>
    %cst_9 = arith.constant 0.000000e+00 : f32
    %13 = vector.broadcast %cst_9 : f32 to vector<512x32xf32>
    %14 = arith.minimumf %10, %13 : vector<512x32xf32>
    %15 = math.exp %14 : vector<512x32xf32>
    %cst_10 = arith.constant 1.000000e+00 : f32
    %16 = vector.broadcast %cst_10 : f32 to vector<512x32xf32>
    %17 = arith.subf %15, %16 : vector<512x32xf32>
    %18 = arith.select %12, %10, %17 : vector<512x32xi1>, vector<512x32xf32>
    %19 = vector.shape_cast %18 : vector<512x32xf32> to vector<8x64x32xf32>
    %20 = vector.extract_strided_slice %19 {offsets = [0, 0, 0], sizes = [8, 40, 32], strides = [1, 1, 1]} : vector<8x64x32xf32> to vector<8x40x32xf32>
    %21 = vector.extract_strided_slice %19 {offsets = [0, 1, 0], sizes = [8, 40, 32], strides = [1, 1, 1]} : vector<8x64x32xf32> to vector<8x40x32xf32>
    %22 = vector.extract_strided_slice %19 {offsets = [0, 2, 0], sizes = [8, 40, 32], strides = [1, 1, 1]} : vector<8x64x32xf32> to vector<8x40x32xf32>
    %23 = vector.extract_strided_slice %19 {offsets = [0, 8, 0], sizes = [8, 40, 32], strides = [1, 1, 1]} : vector<8x64x32xf32> to vector<8x40x32xf32>
    %24 = vector.extract_strided_slice %19 {offsets = [0, 9, 0], sizes = [8, 40, 32], strides = [1, 1, 1]} : vector<8x64x32xf32> to vector<8x40x32xf32>
    %25 = vector.extract_strided_slice %19 {offsets = [0, 10, 0], sizes = [8, 40, 32], strides = [1, 1, 1]} : vector<8x64x32xf32> to vector<8x40x32xf32>
    %26 = vector.extract_strided_slice %19 {offsets = [0, 16, 0], sizes = [8, 40, 32], strides = [1, 1, 1]} : vector<8x64x32xf32> to vector<8x40x32xf32>
    %27 = vector.extract_strided_slice %19 {offsets = [0, 17, 0], sizes = [8, 40, 32], strides = [1, 1, 1]} : vector<8x64x32xf32> to vector<8x40x32xf32>
    %28 = vector.extract_strided_slice %19 {offsets = [0, 18, 0], sizes = [8, 40, 32], strides = [1, 1, 1]} : vector<8x64x32xf32> to vector<8x40x32xf32>
    %29 = tpu.concatenate %20, %21, %22, %23, %24, %25, %26, %27, %28 in 2 : vector<8x40x32xf32>, vector<8x40x32xf32>, vector<8x40x32xf32>, vector<8x40x32xf32>, vector<8x40x32xf32>, vector<8x40x32xf32>, vector<8x40x32xf32>, vector<8x40x32xf32>, vector<8x40x32xf32> -> vector<8x40x288xf32>
    %30 = vector.shape_cast %29 : vector<8x40x288xf32> to vector<320x288xf32>
    %31 = arith.truncf %30 : vector<320x288xf32> to vector<320x288xbf16>
    %cst_11 = arith.constant dense<0.000000e+00> : vector<320x32xf32>
    %32 = tpu.matmul %31, %1, %cst_11 {dimension_numbers = #tpu.dot_dimension_numbers<[1], [0], [0], [1], [0, 0, 1, 1], [], []>} : vector<320x288xbf16>, vector<288x32xbf16>, vector<320x32xf32> -> vector<320x32xf32>
    %c320_i32 = arith.constant 320 : i32
    %33 = arith.muli %c0_i32, %c320_i32 : i32
    %34 = tpu.assume_multiple %33, 320 : i32
    %35 = vector.broadcast %3 : vector<1x32xf32> to vector<320x32xf32>
    %36 = arith.addf %32, %35 : vector<320x32xf32>
    %cst_12 = arith.constant 0.000000e+00 : f32
    %37 = vector.broadcast %cst_12 : f32 to vector<320x32xf32>
    %38 = arith.cmpf ogt, %36, %37 : vector<320x32xf32>
    %cst_13 = arith.constant 0.000000e+00 : f32
    %39 = vector.broadcast %cst_13 : f32 to vector<320x32xf32>
    %40 = arith.minimumf %36, %39 : vector<320x32xf32>
    %41 = math.exp %40 : vector<320x32xf32>
    %cst_14 = arith.constant 1.000000e+00 : f32
    %42 = vector.broadcast %cst_14 : f32 to vector<320x32xf32>
    %43 = arith.subf %41, %42 : vector<320x32xf32>
    %44 = arith.select %38, %36, %43 : vector<320x32xi1>, vector<320x32xf32>
    %45 = arith.index_cast %34 : i32 to index
    %c0_15 = arith.constant 0 : index
    %46 = vector.load %arg6[%45, %c0_15] : memref<320x32xf32, #tpu.memory_space<vmem>>, vector<320x32xf32>
    tpu.vector_store %arg6[%45, %c0_15], %44 {strides = array<i32>} : memref<320x32xf32, #tpu.memory_space<vmem>>, vector<320x32xf32>,
    %c1_i32 = arith.constant 1 : i32
    return
  }
  func.func @transform_0(%arg0: i32) -> (i32, i32) {
    %c0_i32 = arith.constant 0 : i32
    %c0_i32_0 = arith.constant 0 : i32
    return %arg0, %c0_i32 : i32, i32
  }
  func.func @transform_1(%arg0: i32) -> (i32, i32) {
    %c0_i32 = arith.constant 0 : i32
    %c0_i32_0 = arith.constant 0 : i32
    %c0_i32_1 = arith.constant 0 : i32
    return %c0_i32, %c0_i32_0 : i32, i32
  }
  func.func @transform_2(%arg0: i32) -> (i32, i32) {
    %c0_i32 = arith.constant 0 : i32
    %c0_i32_0 = arith.constant 0 : i32
    %c0_i32_1 = arith.constant 0 : i32
    return %c0_i32, %c0_i32_0 : i32, i32
  }
  func.func @transform_3(%arg0: i32) -> (i32, i32) {
    %c0_i32 = arith.constant 0 : i32
    %c0_i32_0 = arith.constant 0 : i32
    %c0_i32_1 = arith.constant 0 : i32
    return %c0_i32, %c0_i32_0 : i32, i32
  }
  func.func @transform_4(%arg0: i32) -> (i32, i32) {
    %c0_i32 = arith.constant 0 : i32
    %c0_i32_0 = arith.constant 0 : i32
    %c0_i32_1 = arith.constant 0 : i32
    return %c0_i32, %c0_i32_0 : i32, i32
  }
  func.func @transform_5(%arg0: i32) -> (i32, i32) {
    %c0_i32 = arith.constant 0 : i32
    %c0_i32_0 = arith.constant 0 : i32
    return %arg0, %c0_i32 : i32, i32
  }
}

</mosaic_0001>

<llo_original>
// kernel: ddpg_conv_body_forward.1
$region0: #{ddpg_conv_body_forward.1}
  #allocation0 [shape = 'u32[]', space=smem, size = 0x4, offset = 0x4, fixed_abs, tag = 'smem constant byte address 0x4 - core index']
  #allocation1 [shape = 'u32[144,128]{1,0:T(1,128)}', space=vmem, size = 0x12000, scoped, tag = 'internal scratch']
  %s0 = inlined_call_operand.vmem [shape: bf16[512,36], index: 0, kind: input, shape index: {}]
  %s1 = inlined_call_operand.vmem [shape: bf16[36,32], index: 1, kind: input, shape index: {}]
  %s2 = inlined_call_operand.vmem [shape: f32[1,32], index: 2, kind: input, shape index: {}]
  %s3 = inlined_call_operand.vmem [shape: bf16[288,32], index: 3, kind: input, shape index: {}]
  %s4 = inlined_call_operand.vmem [shape: f32[1,32], index: 4, kind: input, shape index: {}]
  %s5 = inlined_call_operand.vmem [shape: f32[320,32], index: 5, kind: output, shape index: {}]
  %s6 = sld [smem:[#allocation0]]
  $region30: #{ddpg_conv_body_forward.1} parent=0
    _
  %s8 = ssub.s32 1, %s6
  %s9 = scalar_select 0, %s8, %s6
  // Predicated region
  $region2: #{ddpg_conv_body_forward.1} parent=0 // pred_check
    _
  $region3: #{ddpg_conv_body_forward.1} parent=0 // pred_check_branch
    %11 = sbr.rel (0) target = $region5
  $region4: #{ddpg_conv_body_forward.1} parent=0 // pred_region
    _
  $region5: #{ddpg_conv_body_forward.1} parent=0 // pred_fallthru
    _
  // Predicated region
  $region6: #{ddpg_conv_body_forward.1} parent=0 // pred_check
    _
  $region7: #{ddpg_conv_body_forward.1} parent=0 // pred_check_branch
    %13 = sbr.rel (0) target = $region9
  $region8: #{ddpg_conv_body_forward.1} parent=0 // pred_region
    _
  $region9: #{ddpg_conv_body_forward.1} parent=0 // pred_fallthru
    _
  // Predicated region
  $region10: #{ddpg_conv_body_forward.1} parent=0 // pred_check
    _
  $region11: #{ddpg_conv_body_forward.1} parent=0 // pred_check_branch
    %15 = sbr.rel (0) target = $region13
  $region12: #{ddpg_conv_body_forward.1} parent=0 // pred_region
    _
  $region13: #{ddpg_conv_body_forward.1} parent=0 // pred_fallthru
    _
  // Predicated region
  $region14: #{ddpg_conv_body_forward.1} parent=0 // pred_check
    _
  $region15: #{ddpg_conv_body_forward.1} parent=0 // pred_check_branch
    %17 = sbr.rel (0) target = $region17
  $region16: #{ddpg_conv_body_forward.1} parent=0 // pred_region
    _
  $region17: #{ddpg_conv_body_forward.1} parent=0 // pred_fallthru
    _
  // Predicated region
  $region18: #{ddpg_conv_body_forward.1} parent=0 // pred_check
    _
  $region19: #{ddpg_conv_body_forward.1} parent=0 // pred_check_branch
    %19 = sbr.rel (0) target = $region21
  $region20: #{ddpg_conv_body_forward.1} parent=0 // pred_region
    _
  $region21: #{ddpg_conv_body_forward.1} parent=0 // pred_fallthru
    _
  %v21 = vld [vmem:[%s1] sm:$0xf]
  %v22 = vld [vmem:[%s1 + $0x4] sm:$0xf]
  %v23 = vld [vmem:[%s1 + $0x8] sm:$0xf]
  %v24 = vld [vmem:[%s1 + $0xc] sm:$0xf]
  %v25 = vld [vmem:[%s1 + $0x10] sm:$0x3]
  %v26 = vld [vmem:[%s3] sm:$0xf]
  %v27 = vld [vmem:[%s3 + $0x4] sm:$0xf]
  %v28 = vld [vmem:[%s3 + $0x8] sm:$0xf]
  %v29 = vld [vmem:[%s3 + $0xc] sm:$0xf]
  %v30 = vld [vmem:[%s3 + $0x10] sm:$0xf]
  %v31 = vld [vmem:[%s3 + $0x14] sm:$0xf]
  %v32 = vld [vmem:[%s3 + $0x18] sm:$0xf]
  %v33 = vld [vmem:[%s3 + $0x1c] sm:$0xf]
  %v34 = vld [vmem:[%s3 + $0x20] sm:$0xf]
  %v35 = vld [vmem:[%s3 + $0x24] sm:$0xf]
  %v36 = vld [vmem:[%s3 + $0x28] sm:$0xf]
  %v37 = vld [vmem:[%s3 + $0x2c] sm:$0xf]
  %v38 = vld [vmem:[%s3 + $0x30] sm:$0xf]
  %v39 = vld [vmem:[%s3 + $0x34] sm:$0xf]
  %v40 = vld [vmem:[%s3 + $0x38] sm:$0xf]
  %v41 = vld [vmem:[%s3 + $0x3c] sm:$0xf]
  %v42 = vld [vmem:[%s3 + $0x40] sm:$0xf]
  %v43 = vld [vmem:[%s3 + $0x44] sm:$0xf]
  %v44 = vld [vmem:[%s3 + $0x48] sm:$0xf]
  %v45 = vld [vmem:[%s3 + $0x4c] sm:$0xf]
  %v46 = vld [vmem:[%s3 + $0x50] sm:$0xf]
  %v47 = vld [vmem:[%s3 + $0x54] sm:$0xf]
  %v48 = vld [vmem:[%s3 + $0x58] sm:$0xf]
  %v49 = vld [vmem:[%s3 + $0x5c] sm:$0xf]
  %v50 = vld [vmem:[%s3 + $0x60] sm:$0xf]
  %v51 = vld [vmem:[%s3 + $0x64] sm:$0xf]
  %v52 = vld [vmem:[%s3 + $0x68] sm:$0xf]
  %v53 = vld [vmem:[%s3 + $0x6c] sm:$0xf]
  %v54 = vld [vmem:[%s3 + $0x70] sm:$0xf]
  %v55 = vld [vmem:[%s3 + $0x74] sm:$0xf]
  %v56 = vld [vmem:[%s3 + $0x78] sm:$0xf]
  %v57 = vld [vmem:[%s3 + $0x7c] sm:$0xf]
  %v58 = vld [vmem:[%s3 + $0x80] sm:$0xf]
  %v59 = vld [vmem:[%s3 + $0x84] sm:$0xf]
  %v60 = vld [vmem:[%s3 + $0x88] sm:$0xf]
  %v61 = vld [vmem:[%s3 + $0x8c] sm:$0xf]
  %v62 = vld [vmem:[%s2] sm:$0x1]
  %v63 = vld [vmem:[%s4] sm:$0x1]
  %v64 = vld [vmem:[%s0] sm:$0xf]
  %v65 = vld [vmem:[%s0 + $0x4] sm:$0xf]
  %v66 = vld [vmem:[%s0 + $0x8] sm:$0xf]
  %v67 = vld [vmem:[%s0 + $0xc] sm:$0xf]
  %v68 = vld [vmem:[%s0 + $0x10] sm:$0xf]
  %v69 = vld [vmem:[%s0 + $0x14] sm:$0xf]
  %v70 = vld [vmem:[%s0 + $0x18] sm:$0xf]
  %v71 = vld [vmem:[%s0 + $0x1c] sm:$0xf]
  %v72 = vld [vmem:[%s0 + $0x20] sm:$0xf]
  %v73 = vld [vmem:[%s0 + $0x24] sm:$0xf]
  %v74 = vld [vmem:[%s0 + $0x28] sm:$0xf]
  %v75 = vld [vmem:[%s0 + $0x2c] sm:$0xf]
  %v76 = vld [vmem:[%s0 + $0x30] sm:$0xf]
  %v77 = vld [vmem:[%s0 + $0x34] sm:$0xf]
  %v78 = vld [vmem:[%s0 + $0x38] sm:$0xf]
  %v79 = vld [vmem:[%s0 + $0x3c] sm:$0xf]
  %v80 = vld [vmem:[%s0 + $0x40] sm:$0xf]
  %v81 = vld [vmem:[%s0 + $0x44] sm:$0xf]
  %v82 = vld [vmem:[%s0 + $0x48] sm:$0xf]
  %v83 = vld [vmem:[%s0 + $0x4c] sm:$0xf]
  %v84 = vld [vmem:[%s0 + $0x50] sm:$0xf]
  %v85 = vld [vmem:[%s0 + $0x54] sm:$0xf]
  %v86 = vld [vmem:[%s0 + $0x58] sm:$0xf]
  %v87 = vld [vmem:[%s0 + $0x5c] sm:$0xf]
  %v88 = vld [vmem:[%s0 + $0x60] sm:$0xf]
  %v89 = vld [vmem:[%s0 + $0x64] sm:$0xf]
  %v90 = vld [vmem:[%s0 + $0x68] sm:$0xf]
  %v91 = vld [vmem:[%s0 + $0x6c] sm:$0xf]
  %v92 = vld [vmem:[%s0 + $0x70] sm:$0xf]
  %v93 = vld [vmem:[%s0 + $0x74] sm:$0xf]
  %v94 = vld [vmem:[%s0 + $0x78] sm:$0xf]
  %v95 = vld [vmem:[%s0 + $0x7c] sm:$0xf]
  %v96 = vld [vmem:[%s0 + $0x80] sm:$0xf]
  %v97 = vld [vmem:[%s0 + $0x84] sm:$0xf]
  %v98 = vld [vmem:[%s0 + $0x88] sm:$0xf]
  %v99 = vld [vmem:[%s0 + $0x8c] sm:$0xf]
  %v100 = vld [vmem:[%s0 + $0x90] sm:$0xf]
  %v101 = vld [vmem:[%s0 + $0x94] sm:$0xf]
  %v102 = vld [vmem:[%s0 + $0x98] sm:$0xf]
  %v103 = vld [vmem:[%s0 + $0x9c] sm:$0xf]
  %v104 = vld [vmem:[%s0 + $0xa0] sm:$0xf]
  %v105 = vld [vmem:[%s0 + $0xa4] sm:$0xf]
  %v106 = vld [vmem:[%s0 + $0xa8] sm:$0xf]
  %v107 = vld [vmem:[%s0 + $0xac] sm:$0xf]
  %v108 = vld [vmem:[%s0 + $0xb0] sm:$0xf]
  %v109 = vld [vmem:[%s0 + $0xb4] sm:$0xf]
  %v110 = vld [vmem:[%s0 + $0xb8] sm:$0xf]
  %v111 = vld [vmem:[%s0 + $0xbc] sm:$0xf]
  %v112 = vld [vmem:[%s0 + $0xc0] sm:$0xf]
  %v113 = vld [vmem:[%s0 + $0xc4] sm:$0xf]
  %v114 = vld [vmem:[%s0 + $0xc8] sm:$0xf]
  %v115 = vld [vmem:[%s0 + $0xcc] sm:$0xf]
  %v116 = vld [vmem:[%s0 + $0xd0] sm:$0xf]
  %v117 = vld [vmem:[%s0 + $0xd4] sm:$0xf]
  %v118 = vld [vmem:[%s0 + $0xd8] sm:$0xf]
  %v119 = vld [vmem:[%s0 + $0xdc] sm:$0xf]
  %v120 = vld [vmem:[%s0 + $0xe0] sm:$0xf]
  %v121 = vld [vmem:[%s0 + $0xe4] sm:$0xf]
  %v122 = vld [vmem:[%s0 + $0xe8] sm:$0xf]
  %v123 = vld [vmem:[%s0 + $0xec] sm:$0xf]
  %v124 = vld [vmem:[%s0 + $0xf0] sm:$0xf]
  %v125 = vld [vmem:[%s0 + $0xf4] sm:$0xf]
  %v126 = vld [vmem:[%s0 + $0xf8] sm:$0xf]
  %v127 = vld [vmem:[%s0 + $0xfc] sm:$0xf]
  %v129 = vlaneseq
  %v130 = vshrl.u32 %v129, 7
  %v131 = vsub.s32 0, %v130
  %v132 = vrot.slane %v62, %v131
  %v198 = vunpack.c.l.b16 %v64
  %v199 = vunpack.c.l.b16 %v65
  %v200 = vunpack.c.l.b16 %v66
  %v201 = vunpack.c.l.b16 %v67
  %v202 = vunpack.c.l.b16 %v68
  %v203 = vunpack.c.l.b16 %v69
  %v204 = vunpack.c.l.b16 %v70
  %v205 = vunpack.c.l.b16 %v71
  %v206 = vunpack.c.l.b16 %v72
  %v207 = vunpack.c.l.b16 %v73
  %v208 = vunpack.c.l.b16 %v74
  %v209 = vunpack.c.l.b16 %v75
  %v210 = vunpack.c.l.b16 %v76
  %v211 = vunpack.c.l.b16 %v77
  %v212 = vunpack.c.l.b16 %v78
  %v213 = vunpack.c.l.b16 %v79
  %v214 = vunpack.c.l.b16 %v80
  %v215 = vunpack.c.l.b16 %v81
  %v216 = vunpack.c.l.b16 %v82
  %v217 = vunpack.c.l.b16 %v83
  %v218 = vunpack.c.l.b16 %v84
  %v219 = vunpack.c.l.b16 %v85
  %v220 = vunpack.c.l.b16 %v86
  %v221 = vunpack.c.l.b16 %v87
  %v222 = vunpack.c.l.b16 %v88
  %v223 = vunpack.c.l.b16 %v89
  %v224 = vunpack.c.l.b16 %v90
  %v225 = vunpack.c.l.b16 %v91
  %v226 = vunpack.c.l.b16 %v92
  %v227 = vunpack.c.l.b16 %v93
  %v228 = vunpack.c.l.b16 %v94
  %v229 = vunpack.c.l.b16 %v95
  %v230 = vunpack.c.l.b16 %v96
  %v231 = vunpack.c.l.b16 %v97
  %v232 = vunpack.c.l.b16 %v98
  %v233 = vunpack.c.l.b16 %v99
  %v234 = vunpack.c.l.b16 %v100
  %v235 = vunpack.c.l.b16 %v101
  %v236 = vunpack.c.l.b16 %v102
  %v237 = vunpack.c.l.b16 %v103
  %v238 = vunpack.c.l.b16 %v104
  %v239 = vunpack.c.l.b16 %v105
  %v240 = vunpack.c.l.b16 %v106
  %v241 = vunpack.c.l.b16 %v107
  %v242 = vunpack.c.l.b16 %v108
  %v243 = vunpack.c.l.b16 %v109
  %v244 = vunpack.c.l.b16 %v110
  %v245 = vunpack.c.l.b16 %v111
  %v246 = vunpack.c.l.b16 %v112
  %v247 = vunpack.c.l.b16 %v113
  %v248 = vunpack.c.l.b16 %v114
  %v249 = vunpack.c.l.b16 %v115
  %v250 = vunpack.c.l.b16 %v116
  %v251 = vunpack.c.l.b16 %v117
  %v252 = vunpack.c.l.b16 %v118
  %v253 = vunpack.c.l.b16 %v119
  %v254 = vunpack.c.l.b16 %v120
  %v255 = vunpack.c.l.b16 %v121
  %v256 = vunpack.c.l.b16 %v122
  %v257 = vunpack.c.l.b16 %v123
  %v258 = vunpack.c.l.b16 %v124
  %v259 = vunpack.c.l.b16 %v125
  %v260 = vunpack.c.l.b16 %v126
  %v261 = vunpack.c.l.b16 %v127
  %v262 = vpack.c.b16 %v199, %v198
  %v263 = vpack.c.b16 %v201, %v200
  %v264 = vpack.c.b16 %v203, %v202
  %v265 = vpack.c.b16 %v205, %v204
  %v266 = vpack.c.b16 %v207, %v206
  %v267 = vpack.c.b16 %v209, %v208
  %v268 = vpack.c.b16 %v211, %v210
  %v269 = vpack.c.b16 %v213, %v212
  %v270 = vpack.c.b16 %v215, %v214
  %v271 = vpack.c.b16 %v217, %v216
  %v272 = vpack.c.b16 %v219, %v218
  %v273 = vpack.c.b16 %v221, %v220
  %v274 = vpack.c.b16 %v223, %v222
  %v275 = vpack.c.b16 %v225, %v224
  %v276 = vpack.c.b16 %v227, %v226
  %v277 = vpack.c.b16 %v229, %v228
  %v278 = vpack.c.b16 %v231, %v230
  %v279 = vpack.c.b16 %v233, %v232
  %v280 = vpack.c.b16 %v235, %v234
  %v281 = vpack.c.b16 %v237, %v236
  %v282 = vpack.c.b16 %v239, %v238
  %v283 = vpack.c.b16 %v241, %v240
  %v284 = vpack.c.b16 %v243, %v242
  %v285 = vpack.c.b16 %v245, %v244
  %v286 = vpack.c.b16 %v247, %v246
  %v287 = vpack.c.b16 %v249, %v248
  %v288 = vpack.c.b16 %v251, %v250
  %v289 = vpack.c.b16 %v253, %v252
  %v290 = vpack.c.b16 %v255, %v254
  %v291 = vpack.c.b16 %v257, %v256
  %v292 = vpack.c.b16 %v259, %v258
  %v293 = vpack.c.b16 %v261, %v260
  %v299 = vunpack.c.l.b16 %v21
  %v300 = vunpack.c.l.b16 %v22
  %v301 = vunpack.c.l.b16 %v23
  %v302 = vunpack.c.l.b16 %v24
  %v303 = vunpack.c.l.b16 %v25
  %v304 = vpack.c.b16 %v300, %v299
  %v305 = vpack.c.b16 %v302, %v301
  %v306 = vpack.c.b16 %v303, %v303
  %vm309 = vcmask 293888
  %v311 = vsel %vm309, %v262, 0
  %v314 = vsel %vm309, %v263, 0
  %v317 = vsel %vm309, %v264, 0
  %v320 = vsel %vm309, %v265, 0
  %v323 = vsel %vm309, %v266, 0
  %v326 = vsel %vm309, %v267, 0
  %v329 = vsel %vm309, %v268, 0
  %v332 = vsel %vm309, %v269, 0
  %v335 = vsel %vm309, %v270, 0
  %v338 = vsel %vm309, %v271, 0
  %v341 = vsel %vm309, %v272, 0
  %v344 = vsel %vm309, %v273, 0
  %v347 = vsel %vm309, %v274, 0
  %v350 = vsel %vm309, %v275, 0
  %v353 = vsel %vm309, %v276, 0
  %v356 = vsel %vm309, %v277, 0
  %v359 = vsel %vm309, %v278, 0
  %v362 = vsel %vm309, %v279, 0
  %v365 = vsel %vm309, %v280, 0
  %v368 = vsel %vm309, %v281, 0
  %v371 = vsel %vm309, %v282, 0
  %v374 = vsel %vm309, %v283, 0
  %v377 = vsel %vm309, %v284, 0
  %v380 = vsel %vm309, %v285, 0
  %v383 = vsel %vm309, %v286, 0
  %v386 = vsel %vm309, %v287, 0
  %v389 = vsel %vm309, %v288, 0
  %v392 = vsel %vm309, %v289, 0
  %v395 = vsel %vm309, %v290, 0
  %v398 = vsel %vm309, %v291, 0
  %v401 = vsel %vm309, %v292, 0
  %v404 = vsel %vm309, %v293, 0
  %vm406 = vcmask 1041408
  %v408 = vsel %vm406, %v306, 0
  %410 = vmatprep.subr.bf16.mxu0 0
  %411 = vmatpush1.bf16.msra.mxu0 %v304
  %412 = vmatprep.subr.bf16.mxu0 0
  %413 = vmatpush1.bf16.msra.mxu0 %v305
  %414 = vmatprep.subr.bf16.mxu0 0
  %415 = vmatpush1.bf16.msra.mxu0 %v408
  %416 = vmatprep.subr.bf16.mxu0 0
  %417 = vmatpush1.bf16.msra.mxu0 0
  %418 = vmatprep.subr.bf16.mxu0 0
  %419 = vmatpush1.bf16.msra.mxu0 0
  %420 = vmatprep.subr.bf16.mxu0 0
  %421 = vmatpush1.bf16.msra.mxu0 0
  %422 = vmatprep.subr.bf16.mxu0 0
  %423 = vmatpush1.bf16.msra.mxu0 0
  %424 = vmatprep.subr.bf16.mxu0 0
  %425 = vmatpush1.bf16.msra.mxu0 0
  %426 = vmatprep.subr.bf16.mxu0 0
  %427 = vmatpush1.bf16.msra.mxu0 0
  %428 = vmatprep.subr.bf16.mxu0 0
  %429 = vmatpush1.bf16.msra.mxu0 0
  %430 = vmatprep.subr.bf16.mxu0 0
  %431 = vmatpush1.bf16.msra.mxu0 0
  %432 = vmatprep.subr.bf16.mxu0 0
  %433 = vmatpush1.bf16.msra.mxu0 0
  %434 = vmatprep.subr.bf16.mxu0 0
  %435 = vmatpush1.bf16.msra.mxu0 0
  %436 = vmatprep.subr.bf16.mxu0 0
  %437 = vmatpush1.bf16.msra.mxu0 0
  %438 = vmatprep.subr.bf16.mxu0 0
  %439 = vmatpush1.bf16.msra.mxu0 0
  %440 = vmatprep.subr.bf16.mxu0 0
  %441 = vmatpush1.bf16.msra.mxu0 0
  %442 = vmatprep.mubr.bf16.mxu0 0
  %443 = vmatmul.mubr.bf16.gmra.mrb[0].mxu0 %v311
  %v444 = vpop.f32.mrb[0].mxu0
  %v445 = vadd.f32 %v132, %v444
  %v446 = vpop.f32.mrb[0].mxu0
  %v447 = vpop.f32.mrb[0].mxu0
  %v448 = vadd.f32 %v132, %v447
  %v449 = vpop.f32.mrb[0].mxu0
  %450 = vmatprep.mubr.bf16.mxu0 0
  %451 = vmatmul.mubr.bf16.gmra.mrb[0].mxu0 %v314
  %v452 = vpop.f32.mrb[0].mxu0
  %v453 = vadd.f32 %v132, %v452
  %v454 = vpop.f32.mrb[0].mxu0
  %v455 = vpop.f32.mrb[0].mxu0
  %v456 = vadd.f32 %v132, %v455
  %v457 = vpop.f32.mrb[0].mxu0
  %458 = vmatprep.mubr.bf16.mxu0 0
  %459 = vmatmul.mubr.bf16.gmra.mrb[0].mxu0 %v317
  %v460 = vpop.f32.mrb[0].mxu0
  %v461 = vadd.f32 %v132, %v460
  %v462 = vpop.f32.mrb[0].mxu0
  %v463 = vpop.f32.mrb[0].mxu0
  %v464 = vadd.f32 %v132, %v463
  %v465 = vpop.f32.mrb[0].mxu0
  %466 = vmatprep.mubr.bf16.mxu0 0
  %467 = vmatmul.mubr.bf16.gmra.mrb[0].mxu0 %v320
  %v468 = vpop.f32.mrb[0].mxu0
  %v469 = vadd.f32 %v132, %v468
  %v470 = vpop.f32.mrb[0].mxu0
  %v471 = vpop.f32.mrb[0].mxu0
  %v472 = vadd.f32 %v132, %v471
  %v473 = vpop.f32.mrb[0].mxu0
  %474 = vmatprep.mubr.bf16.mxu0 0
  %475 = vmatmul.mubr.bf16.gmra.mrb[0].mxu0 %v323
  %v476 = vpop.f32.mrb[0].mxu0
  %v477 = vadd.f32 %v132, %v476
  %v478 = vpop.f32.mrb[0].mxu0
  %v479 = vpop.f32.mrb[0].mxu0
  %v480 = vadd.f32 %v132, %v479
  %v481 = vpop.f32.mrb[0].mxu0
  %482 = vmatprep.mubr.bf16.mxu0 0
  %483 = vmatmul.mubr.bf16.gmra.mrb[0].mxu0 %v326
  %v484 = vpop.f32.mrb[0].mxu0
  %v485 = vadd.f32 %v132, %v484
  %v486 = vpop.f32.mrb[0].mxu0
  %v487 = vpop.f32.mrb[0].mxu0
  %v488 = vadd.f32 %v132, %v487
  %v489 = vpop.f32.mrb[0].mxu0
  %490 = vmatprep.mubr.bf16.mxu0 0
  %491 = vmatmul.mubr.bf16.gmra.mrb[0].mxu0 %v329
  %v492 = vpop.f32.mrb[0].mxu0
  %v493 = vadd.f32 %v132, %v492
  %v494 = vpop.f32.mrb[0].mxu0
  %v495 = vpop.f32.mrb[0].mxu0
  %v496 = vadd.f32 %v132, %v495
  %v497 = vpop.f32.mrb[0].mxu0
  %498 = vmatprep.mubr.bf16.mxu0 0
  %499 = vmatmul.mubr.bf16.gmra.mrb[0].mxu0 %v332
  %v500 = vpop.f32.mrb[0].mxu0
  %v501 = vadd.f32 %v132, %v500
  %v502 = vpop.f32.mrb[0].mxu0
  %v503 = vpop.f32.mrb[0].mxu0
  %v504 = vadd.f32 %v132, %v503
  %v505 = vpop.f32.mrb[0].mxu0
  %506 = vmatprep.mubr.bf16.mxu0 0
  %507 = vmatmul.mubr.bf16.gmra.mrb[0].mxu0 %v335
  %v508 = vpop.f32.mrb[0].mxu0
  %v509 = vadd.f32 %v132, %v508
  %v510 = vpop.f32.mrb[0].mxu0
  %v511 = vpop.f32.mrb[0].mxu0
  %v512 = vadd.f32 %v132, %v511
  %v513 = vpop.f32.mrb[0].mxu0
  %514 = vmatprep.mubr.bf16.mxu0 0
  %515 = vmatmul.mubr.bf16.gmra.mrb[0].mxu0 %v338
  %v516 = vpop.f32.mrb[0].mxu0
  %v517 = vadd.f32 %v132, %v516
  %v518 = vpop.f32.mrb[0].mxu0
  %v519 = vpop.f32.mrb[0].mxu0
  %v520 = vadd.f32 %v132, %v519
  %v521 = vpop.f32.mrb[0].mxu0
  %522 = vmatprep.mubr.bf16.mxu0 0
  %523 = vmatmul.mubr.bf16.gmra.mrb[0].mxu0 %v341
  %v524 = vpop.f32.mrb[0].mxu0
  %v525 = vadd.f32 %v132, %v524
  %v526 = vpop.f32.mrb[0].mxu0
  %v527 = vpop.f32.mrb[0].mxu0
  %v528 = vadd.f32 %v132, %v527
  %v529 = vpop.f32.mrb[0].mxu0
  %530 = vmatprep.mubr.bf16.mxu0 0
  %531 = vmatmul.mubr.bf16.gmra.mrb[0].mxu0 %v344
  %v532 = vpop.f32.mrb[0].mxu0
  %v533 = vadd.f32 %v132, %v532
  %v534 = vpop.f32.mrb[0].mxu0
  %v535 = vpop.f32.mrb[0].mxu0
  %v536 = vadd.f32 %v132, %v535
  %v537 = vpop.f32.mrb[0].mxu0
  %538 = vmatprep.mubr.bf16.mxu0 0
  %539 = vmatmul.mubr.bf16.gmra.mrb[0].mxu0 %v347
  %v540 = vpop.f32.mrb[0].mxu0
  %v541 = vadd.f32 %v132, %v540
  %v542 = vpop.f32.mrb[0].mxu0
  %v543 = vpop.f32.mrb[0].mxu0
  %v544 = vadd.f32 %v132, %v543
  %v545 = vpop.f32.mrb[0].mxu0
  %546 = vmatprep.mubr.bf16.mxu0 0
  %547 = vmatmul.mubr.bf16.gmra.mrb[0].mxu0 %v350
  %v548 = vpop.f32.mrb[0].mxu0
  %v549 = vadd.f32 %v132, %v548
  %v550 = vpop.f32.mrb[0].mxu0
  %v551 = vpop.f32.mrb[0].mxu0
  %v552 = vadd.f32 %v132, %v551
  %v553 = vpop.f32.mrb[0].mxu0
  %554 = vmatprep.mubr.bf16.mxu0 0
  %555 = vmatmul.mubr.bf16.gmra.mrb[0].mxu0 %v353
  %v556 = vpop.f32.mrb[0].mxu0
  %v557 = vadd.f32 %v132, %v556
  %v558 = vpop.f32.mrb[0].mxu0
  %v559 = vpop.f32.mrb[0].mxu0
  %v560 = vadd.f32 %v132, %v559
  %v561 = vpop.f32.mrb[0].mxu0
  %562 = vmatprep.mubr.bf16.mxu0 0
  %563 = vmatmul.mubr.bf16.gmra.mrb[0].mxu0 %v356
  %v564 = vpop.f32.mrb[0].mxu0
  %v565 = vadd.f32 %v132, %v564
  %v566 = vpop.f32.mrb[0].mxu0
  %v567 = vpop.f32.mrb[0].mxu0
  %v568 = vadd.f32 %v132, %v567
  %v569 = vpop.f32.mrb[0].mxu0
  %570 = vmatprep.mubr.bf16.mxu0 0
  %571 = vmatmul.mubr.bf16.gmra.mrb[0].mxu0 %v359
  %v572 = vpop.f32.mrb[0].mxu0
  %v573 = vadd.f32 %v132, %v572
  %v574 = vpop.f32.mrb[0].mxu0
  %v575 = vpop.f32.mrb[0].mxu0
  %v576 = vadd.f32 %v132, %v575
  %v577 = vpop.f32.mrb[0].mxu0
  %578 = vmatprep.mubr.bf16.mxu0 0
  %579 = vmatmul.mubr.bf16.gmra.mrb[0].mxu0 %v362
  %v580 = vpop.f32.mrb[0].mxu0
  %v581 = vadd.f32 %v132, %v580
  %v582 = vpop.f32.mrb[0].mxu0
  %v583 = vpop.f32.mrb[0].mxu0
  %v584 = vadd.f32 %v132, %v583
  %v585 = vpop.f32.mrb[0].mxu0
  %586 = vmatprep.mubr.bf16.mxu0 0
  %587 = vmatmul.mubr.bf16.gmra.mrb[0].mxu0 %v365
  %v588 = vpop.f32.mrb[0].mxu0
  %v589 = vadd.f32 %v132, %v588
  %v590 = vpop.f32.mrb[0].mxu0
  %v591 = vpop.f32.mrb[0].mxu0
  %v592 = vadd.f32 %v132, %v591
  %v593 = vpop.f32.mrb[0].mxu0
  %594 = vmatprep.mubr.bf16.mxu0 0
  %595 = vmatmul.mubr.bf16.gmra.mrb[0].mxu0 %v368
  %v596 = vpop.f32.mrb[0].mxu0
  %v597 = vadd.f32 %v132, %v596
  %v598 = vpop.f32.mrb[0].mxu0
  %v599 = vpop.f32.mrb[0].mxu0
  %v600 = vadd.f32 %v132, %v599
  %v601 = vpop.f32.mrb[0].mxu0
  %602 = vmatprep.mubr.bf16.mxu0 0
  %603 = vmatmul.mubr.bf16.gmra.mrb[0].mxu0 %v371
  %v604 = vpop.f32.mrb[0].mxu0
  %v605 = vadd.f32 %v132, %v604
  %v606 = vpop.f32.mrb[0].mxu0
  %v607 = vpop.f32.mrb[0].mxu0
  %v608 = vadd.f32 %v132, %v607
  %v609 = vpop.f32.mrb[0].mxu0
  %610 = vmatprep.mubr.bf16.mxu0 0
  %611 = vmatmul.mubr.bf16.gmra.mrb[0].mxu0 %v374
  %v612 = vpop.f32.mrb[0].mxu0
  %v613 = vadd.f32 %v132, %v612
  %v614 = vpop.f32.mrb[0].mxu0
  %v615 = vpop.f32.mrb[0].mxu0
  %v616 = vadd.f32 %v132, %v615
  %v617 = vpop.f32.mrb[0].mxu0
  %618 = vmatprep.mubr.bf16.mxu0 0
  %619 = vmatmul.mubr.bf16.gmra.mrb[0].mxu0 %v377
  %v620 = vpop.f32.mrb[0].mxu0
  %v621 = vadd.f32 %v132, %v620
  %v622 = vpop.f32.mrb[0].mxu0
  %v623 = vpop.f32.mrb[0].mxu0
  %v624 = vadd.f32 %v132, %v623
  %v625 = vpop.f32.mrb[0].mxu0
  %626 = vmatprep.mubr.bf16.mxu0 0
  %627 = vmatmul.mubr.bf16.gmra.mrb[0].mxu0 %v380
  %v628 = vpop.f32.mrb[0].mxu0
  %v629 = vadd.f32 %v132, %v628
  %v630 = vpop.f32.mrb[0].mxu0
  %v631 = vpop.f32.mrb[0].mxu0
  %v632 = vadd.f32 %v132, %v631
  %v633 = vpop.f32.mrb[0].mxu0
  %634 = vmatprep.mubr.bf16.mxu0 0
  %635 = vmatmul.mubr.bf16.gmra.mrb[0].mxu0 %v383
  %v636 = vpop.f32.mrb[0].mxu0
  %v637 = vadd.f32 %v132, %v636
  %v638 = vpop.f32.mrb[0].mxu0
  %v639 = vpop.f32.mrb[0].mxu0
  %v640 = vadd.f32 %v132, %v639
  %v641 = vpop.f32.mrb[0].mxu0
  %642 = vmatprep.mubr.bf16.mxu0 0
  %643 = vmatmul.mubr.bf16.gmra.mrb[0].mxu0 %v386
  %v644 = vpop.f32.mrb[0].mxu0
  %v645 = vadd.f32 %v132, %v644
  %v646 = vpop.f32.mrb[0].mxu0
  %v647 = vpop.f32.mrb[0].mxu0
  %v648 = vadd.f32 %v132, %v647
  %v649 = vpop.f32.mrb[0].mxu0
  %650 = vmatprep.mubr.bf16.mxu0 0
  %651 = vmatmul.mubr.bf16.gmra.mrb[0].mxu0 %v389
  %v652 = vpop.f32.mrb[0].mxu0
  %v653 = vadd.f32 %v132, %v652
  %v654 = vpop.f32.mrb[0].mxu0
  %v655 = vpop.f32.mrb[0].mxu0
  %v656 = vadd.f32 %v132, %v655
  %v657 = vpop.f32.mrb[0].mxu0
  %658 = vmatprep.mubr.bf16.mxu0 0
  %659 = vmatmul.mubr.bf16.gmra.mrb[0].mxu0 %v392
  %v660 = vpop.f32.mrb[0].mxu0
  %v661 = vadd.f32 %v132, %v660
  %v662 = vpop.f32.mrb[0].mxu0
  %v663 = vpop.f32.mrb[0].mxu0
  %v664 = vadd.f32 %v132, %v663
  %v665 = vpop.f32.mrb[0].mxu0
  %666 = vmatprep.mubr.bf16.mxu0 0
  %667 = vmatmul.mubr.bf16.gmra.mrb[0].mxu0 %v395
  %v668 = vpop.f32.mrb[0].mxu0
  %v669 = vadd.f32 %v132, %v668
  %v670 = vpop.f32.mrb[0].mxu0
  %v671 = vpop.f32.mrb[0].mxu0
  %v672 = vadd.f32 %v132, %v671
  %v673 = vpop.f32.mrb[0].mxu0
  %674 = vmatprep.mubr.bf16.mxu0 0
  %675 = vmatmul.mubr.bf16.gmra.mrb[0].mxu0 %v398
  %v676 = vpop.f32.mrb[0].mxu0
  %v677 = vadd.f32 %v132, %v676
  %v678 = vpop.f32.mrb[0].mxu0
  %v679 = vpop.f32.mrb[0].mxu0
  %v680 = vadd.f32 %v132, %v679
  %v681 = vpop.f32.mrb[0].mxu0
  %682 = vmatprep.mubr.bf16.mxu0 0
  %683 = vmatmul.mubr.bf16.gmra.mrb[0].mxu0 %v401
  %v684 = vpop.f32.mrb[0].mxu0
  %v685 = vadd.f32 %v132, %v684
  %v686 = vpop.f32.mrb[0].mxu0
  %v687 = vpop.f32.mrb[0].mxu0
  %v688 = vadd.f32 %v132, %v687
  %v689 = vpop.f32.mrb[0].mxu0
  %690 = vmatprep.mubr.bf16.mxu0 0
  %691 = vmatmul.mubr.bf16.gmra.mrb[0].mxu0 %v404
  %v692 = vpop.f32.mrb[0].mxu0
  %v693 = vadd.f32 %v132, %v692
  %v694 = vpop.f32.mrb[0].mxu0
  %v695 = vpop.f32.mrb[0].mxu0
  %v696 = vadd.f32 %v132, %v695
  %v697 = vpop.f32.mrb[0].mxu0
  %698 = vdwg.mxu0
  %vm699 = vcmp.gt.f32.partialorder %v445, 0.0
  %vm700 = vcmp.gt.f32.partialorder %v448, 0.0
  %vm701 = vcmp.gt.f32.partialorder %v453, 0.0
  %vm702 = vcmp.gt.f32.partialorder %v456, 0.0
  %vm703 = vcmp.gt.f32.partialorder %v461, 0.0
  %vm704 = vcmp.gt.f32.partialorder %v464, 0.0
  %vm705 = vcmp.gt.f32.partialorder %v469, 0.0
  %vm706 = vcmp.gt.f32.partialorder %v472, 0.0
  %vm707 = vcmp.gt.f32.partialorder %v477, 0.0
  %vm708 = vcmp.gt.f32.partialorder %v480, 0.0
  %vm709 = vcmp.gt.f32.partialorder %v485, 0.0
  %vm710 = vcmp.gt.f32.partialorder %v488, 0.0
  %vm711 = vcmp.gt.f32.partialorder %v493, 0.0
  %vm712 = vcmp.gt.f32.partialorder %v496, 0.0
  %vm713 = vcmp.gt.f32.partialorder %v501, 0.0
  %vm714 = vcmp.gt.f32.partialorder %v504, 0.0
  %vm715 = vcmp.gt.f32.partialorder %v509, 0.0
  %vm716 = vcmp.gt.f32.partialorder %v512, 0.0
  %vm717 = vcmp.gt.f32.partialorder %v517, 0.0
  %vm718 = vcmp.gt.f32.partialorder %v520, 0.0
  %vm719 = vcmp.gt.f32.partialorder %v525, 0.0
  %vm720 = vcmp.gt.f32.partialorder %v528, 0.0
  %vm721 = vcmp.gt.f32.partialorder %v533, 0.0
  %vm722 = vcmp.gt.f32.partialorder %v536, 0.0
  %vm723 = vcmp.gt.f32.partialorder %v541, 0.0
  %vm724 = vcmp.gt.f32.partialorder %v544, 0.0
  %vm725 = vcmp.gt.f32.partialorder %v549, 0.0
  %vm726 = vcmp.gt.f32.partialorder %v552, 0.0
  %vm727 = vcmp.gt.f32.partialorder %v557, 0.0
  %vm728 = vcmp.gt.f32.partialorder %v560, 0.0
  %vm729 = vcmp.gt.f32.partialorder %v565, 0.0
  %vm730 = vcmp.gt.f32.partialorder %v568, 0.0
  %vm731 = vcmp.gt.f32.partialorder %v573, 0.0
  %vm732 = vcmp.gt.f32.partialorder %v576, 0.0
  %vm733 = vcmp.gt.f32.partialorder %v581, 0.0
  %vm734 = vcmp.gt.f32.partialorder %v584, 0.0
  %vm735 = vcmp.gt.f32.partialorder %v589, 0.0
  %vm736 = vcmp.gt.f32.partialorder %v592, 0.0
  %vm737 = vcmp.gt.f32.partialorder %v597, 0.0
  %vm738 = vcmp.gt.f32.partialorder %v600, 0.0
  %vm739 = vcmp.gt.f32.partialorder %v605, 0.0
  %vm740 = vcmp.gt.f32.partialorder %v608, 0.0
  %vm741 = vcmp.gt.f32.partialorder %v613, 0.0
  %vm742 = vcmp.gt.f32.partialorder %v616, 0.0
  %vm743 = vcmp.gt.f32.partialorder %v621, 0.0
  %vm744 = vcmp.gt.f32.partialorder %v624, 0.0
  %vm745 = vcmp.gt.f32.partialorder %v629, 0.0
  %vm746 = vcmp.gt.f32.partialorder %v632, 0.0
  %vm747 = vcmp.gt.f32.partialorder %v637, 0.0
  %vm748 = vcmp.gt.f32.partialorder %v640, 0.0
  %vm749 = vcmp.gt.f32.partialorder %v645, 0.0
  %vm750 = vcmp.gt.f32.partialorder %v648, 0.0
  %vm751 = vcmp.gt.f32.partialorder %v653, 0.0
  %vm752 = vcmp.gt.f32.partialorder %v656, 0.0
  %vm753 = vcmp.gt.f32.partialorder %v661, 0.0
  %vm754 = vcmp.gt.f32.partialorder %v664, 0.0
  %vm755 = vcmp.gt.f32.partialorder %v669, 0.0
  %vm756 = vcmp.gt.f32.partialorder %v672, 0.0
  %vm757 = vcmp.gt.f32.partialorder %v677, 0.0
  %vm758 = vcmp.gt.f32.partialorder %v680, 0.0
  %vm759 = vcmp.gt.f32.partialorder %v685, 0.0
  %vm760 = vcmp.gt.f32.partialorder %v688, 0.0
  %vm761 = vcmp.gt.f32.partialorder %v693, 0.0
  %vm762 = vcmp.gt.f32.partialorder %v696, 0.0
  %v763 = vmin.f32 %v445, 0.0
  %v764 = vmin.f32 %v448, 0.0
  %v765 = vmin.f32 %v453, 0.0
  %v766 = vmin.f32 %v456, 0.0
  %v767 = vmin.f32 %v461, 0.0
  %v768 = vmin.f32 %v464, 0.0
  %v769 = vmin.f32 %v469, 0.0
  %v770 = vmin.f32 %v472, 0.0
  %v771 = vmin.f32 %v477, 0.0
  %v772 = vmin.f32 %v480, 0.0
  %v773 = vmin.f32 %v485, 0.0
  %v774 = vmin.f32 %v488, 0.0
  %v775 = vmin.f32 %v493, 0.0
  %v776 = vmin.f32 %v496, 0.0
  %v777 = vmin.f32 %v501, 0.0
  %v778 = vmin.f32 %v504, 0.0
  %v779 = vmin.f32 %v509, 0.0
  %v780 = vmin.f32 %v512, 0.0
  %v781 = vmin.f32 %v517, 0.0
  %v782 = vmin.f32 %v520, 0.0
  %v783 = vmin.f32 %v525, 0.0
  %v784 = vmin.f32 %v528, 0.0
  %v785 = vmin.f32 %v533, 0.0
  %v786 = vmin.f32 %v536, 0.0
  %v787 = vmin.f32 %v541, 0.0
  %v788 = vmin.f32 %v544, 0.0
  %v789 = vmin.f32 %v549, 0.0
  %v790 = vmin.f32 %v552, 0.0
  %v791 = vmin.f32 %v557, 0.0
  %v792 = vmin.f32 %v560, 0.0
  %v793 = vmin.f32 %v565, 0.0
  %v794 = vmin.f32 %v568, 0.0
  %v795 = vmin.f32 %v573, 0.0
  %v796 = vmin.f32 %v576, 0.0
  %v797 = vmin.f32 %v581, 0.0
  %v798 = vmin.f32 %v584, 0.0
  %v799 = vmin.f32 %v589, 0.0
  %v800 = vmin.f32 %v592, 0.0
  %v801 = vmin.f32 %v597, 0.0
  %v802 = vmin.f32 %v600, 0.0
  %v803 = vmin.f32 %v605, 0.0
  %v804 = vmin.f32 %v608, 0.0
  %v805 = vmin.f32 %v613, 0.0
  %v806 = vmin.f32 %v616, 0.0
  %v807 = vmin.f32 %v621, 0.0
  %v808 = vmin.f32 %v624, 0.0
  %v809 = vmin.f32 %v629, 0.0
  %v810 = vmin.f32 %v632, 0.0
  %v811 = vmin.f32 %v637, 0.0
  %v812 = vmin.f32 %v640, 0.0
  %v813 = vmin.f32 %v645, 0.0
  %v814 = vmin.f32 %v648, 0.0
  %v815 = vmin.f32 %v653, 0.0
  %v816 = vmin.f32 %v656, 0.0
  %v817 = vmin.f32 %v661, 0.0
  %v818 = vmin.f32 %v664, 0.0
  %v819 = vmin.f32 %v669, 0.0
  %v820 = vmin.f32 %v672, 0.0
  %v821 = vmin.f32 %v677, 0.0
  %v822 = vmin.f32 %v680, 0.0
  %v823 = vmin.f32 %v685, 0.0
  %v824 = vmin.f32 %v688, 0.0
  %v825 = vmin.f32 %v693, 0.0
  %v826 = vmin.f32 %v696, 0.0
  %v827 = vmul.f32 %v763, 1.442695
  %v828 = vpow.pop %v827
  %v829 = vmul.f32 %v764, 1.442695
  %v830 = vpow.pop %v829
  %v831 = vmul.f32 %v765, 1.442695
  %v832 = vpow.pop %v831
  %v833 = vmul.f32 %v766, 1.442695
  %v834 = vpow.pop %v833
  %v835 = vmul.f32 %v767, 1.442695
  %v836 = vpow.pop %v835
  %v837 = vmul.f32 %v768, 1.442695
  %v838 = vpow.pop %v837
  %v839 = vmul.f32 %v769, 1.442695
  %v840 = vpow.pop %v839
  %v841 = vmul.f32 %v770, 1.442695
  %v842 = vpow.pop %v841
  %v843 = vmul.f32 %v771, 1.442695
  %v844 = vpow.pop %v843
  %v845 = vmul.f32 %v772, 1.442695
  %v846 = vpow.pop %v845
  %v847 = vmul.f32 %v773, 1.442695
  %v848 = vpow.pop %v847
  %v849 = vmul.f32 %v774, 1.442695
  %v850 = vpow.pop %v849
  %v851 = vmul.f32 %v775, 1.442695
  %v852 = vpow.pop %v851
  %v853 = vmul.f32 %v776, 1.442695
  %v854 = vpow.pop %v853
  %v855 = vmul.f32 %v777, 1.442695
  %v856 = vpow.pop %v855
  %v857 = vmul.f32 %v778, 1.442695
  %v858 = vpow.pop %v857
  %v859 = vmul.f32 %v779, 1.442695
  %v860 = vpow.pop %v859
  %v861 = vmul.f32 %v780, 1.442695
  %v862 = vpow.pop %v861
  %v863 = vmul.f32 %v781, 1.442695
  %v864 = vpow.pop %v863
  %v865 = vmul.f32 %v782, 1.442695
  %v866 = vpow.pop %v865
  %v867 = vmul.f32 %v783, 1.442695
  %v868 = vpow.pop %v867
  %v869 = vmul.f32 %v784, 1.442695
  %v870 = vpow.pop %v869
  %v871 = vmul.f32 %v785, 1.442695
  %v872 = vpow.pop %v871
  %v873 = vmul.f32 %v786, 1.442695
  %v874 = vpow.pop %v873
  %v875 = vmul.f32 %v787, 1.442695
  %v876 = vpow.pop %v875
  %v877 = vmul.f32 %v788, 1.442695
  %v878 = vpow.pop %v877
  %v879 = vmul.f32 %v789, 1.442695
  %v880 = vpow.pop %v879
  %v881 = vmul.f32 %v790, 1.442695
  %v882 = vpow.pop %v881
  %v883 = vmul.f32 %v791, 1.442695
  %v884 = vpow.pop %v883
  %v885 = vmul.f32 %v792, 1.442695
  %v886 = vpow.pop %v885
  %v887 = vmul.f32 %v793, 1.442695
  %v888 = vpow.pop %v887
  %v889 = vmul.f32 %v794, 1.442695
  %v890 = vpow.pop %v889
  %v891 = vmul.f32 %v795, 1.442695
  %v892 = vpow.pop %v891
  %v893 = vmul.f32 %v796, 1.442695
  %v894 = vpow.pop %v893
  %v895 = vmul.f32 %v797, 1.442695
  %v896 = vpow.pop %v895
  %v897 = vmul.f32 %v798, 1.442695
  %v898 = vpow.pop %v897
  %v899 = vmul.f32 %v799, 1.442695
  %v900 = vpow.pop %v899
  %v901 = vmul.f32 %v800, 1.442695
  %v902 = vpow.pop %v901
  %v903 = vmul.f32 %v801, 1.442695
  %v904 = vpow.pop %v903
  %v905 = vmul.f32 %v802, 1.442695
  %v906 = vpow.pop %v905
  %v907 = vmul.f32 %v803, 1.442695
  %v908 = vpow.pop %v907
  %v909 = vmul.f32 %v804, 1.442695
  %v910 = vpow.pop %v909
  %v911 = vmul.f32 %v805, 1.442695
  %v912 = vpow.pop %v911
  %v913 = vmul.f32 %v806, 1.442695
  %v914 = vpow.pop %v913
  %v915 = vmul.f32 %v807, 1.442695
  %v916 = vpow.pop %v915
  %v917 = vmul.f32 %v808, 1.442695
  %v918 = vpow.pop %v917
  %v919 = vmul.f32 %v809, 1.442695
  %v920 = vpow.pop %v919
  %v921 = vmul.f32 %v810, 1.442695
  %v922 = vpow.pop %v921
  %v923 = vmul.f32 %v811, 1.442695
  %v924 = vpow.pop %v923
  %v925 = vmul.f32 %v812, 1.442695
  %v926 = vpow.pop %v925
  %v927 = vmul.f32 %v813, 1.442695
  %v928 = vpow.pop %v927
  %v929 = vmul.f32 %v814, 1.442695
  %v930 = vpow.pop %v929
  %v931 = vmul.f32 %v815, 1.442695
  %v932 = vpow.pop %v931
  %v933 = vmul.f32 %v816, 1.442695
  %v934 = vpow.pop %v933
  %v935 = vmul.f32 %v817, 1.442695
  %v936 = vpow.pop %v935
  %v937 = vmul.f32 %v818, 1.442695
  %v938 = vpow.pop %v937
  %v939 = vmul.f32 %v819, 1.442695
  %v940 = vpow.pop %v939
  %v941 = vmul.f32 %v820, 1.442695
  %v942 = vpow.pop %v941
  %v943 = vmul.f32 %v821, 1.442695
  %v944 = vpow.pop %v943
  %v945 = vmul.f32 %v822, 1.442695
  %v946 = vpow.pop %v945
  %v947 = vmul.f32 %v823, 1.442695
  %v948 = vpow.pop %v947
  %v949 = vmul.f32 %v824, 1.442695
  %v950 = vpow.pop %v949
  %v951 = vmul.f32 %v825, 1.442695
  %v952 = vpow.pop %v951
  %v953 = vmul.f32 %v826, 1.442695
  %v954 = vpow.pop %v953
  %v955 = vsub.f32 %v828, 1.0
  %v956 = vsub.f32 %v830, 1.0
  %v957 = vsub.f32 %v832, 1.0
  %v958 = vsub.f32 %v834, 1.0
  %v959 = vsub.f32 %v836, 1.0
  %v960 = vsub.f32 %v838, 1.0
  %v961 = vsub.f32 %v840, 1.0
  %v962 = vsub.f32 %v842, 1.0
  %v963 = vsub.f32 %v844, 1.0
  %v964 = vsub.f32 %v846, 1.0
  %v965 = vsub.f32 %v848, 1.0
  %v966 = vsub.f32 %v850, 1.0
  %v967 = vsub.f32 %v852, 1.0
  %v968 = vsub.f32 %v854, 1.0
  %v969 = vsub.f32 %v856, 1.0
  %v970 = vsub.f32 %v858, 1.0
  %v971 = vsub.f32 %v860, 1.0
  %v972 = vsub.f32 %v862, 1.0
  %v973 = vsub.f32 %v864, 1.0
  %v974 = vsub.f32 %v866, 1.0
  %v975 = vsub.f32 %v868, 1.0
  %v976 = vsub.f32 %v870, 1.0
  %v977 = vsub.f32 %v872, 1.0
  %v978 = vsub.f32 %v874, 1.0
  %v979 = vsub.f32 %v876, 1.0
  %v980 = vsub.f32 %v878, 1.0
  %v981 = vsub.f32 %v880, 1.0
  %v982 = vsub.f32 %v882, 1.0
  %v983 = vsub.f32 %v884, 1.0
  %v984 = vsub.f32 %v886, 1.0
  %v985 = vsub.f32 %v888, 1.0
  %v986 = vsub.f32 %v890, 1.0
  %v987 = vsub.f32 %v892, 1.0
  %v988 = vsub.f32 %v894, 1.0
  %v989 = vsub.f32 %v896, 1.0
  %v990 = vsub.f32 %v898, 1.0
  %v991 = vsub.f32 %v900, 1.0
  %v992 = vsub.f32 %v902, 1.0
  %v993 = vsub.f32 %v904, 1.0
  %v994 = vsub.f32 %v906, 1.0
  %v995 = vsub.f32 %v908, 1.0
  %v996 = vsub.f32 %v910, 1.0
  %v997 = vsub.f32 %v912, 1.0
  %v998 = vsub.f32 %v914, 1.0
  %v999 = vsub.f32 %v916, 1.0
  %v1000 = vsub.f32 %v918, 1.0
  %v1001 = vsub.f32 %v920, 1.0
  %v1002 = vsub.f32 %v922, 1.0
  %v1003 = vsub.f32 %v924, 1.0
  %v1004 = vsub.f32 %v926, 1.0
  %v1005 = vsub.f32 %v928, 1.0
  %v1006 = vsub.f32 %v930, 1.0
  %v1007 = vsub.f32 %v932, 1.0
  %v1008 = vsub.f32 %v934, 1.0
  %v1009 = vsub.f32 %v936, 1.0
  %v1010 = vsub.f32 %v938, 1.0
  %v1011 = vsub.f32 %v940, 1.0
  %v1012 = vsub.f32 %v942, 1.0
  %v1013 = vsub.f32 %v944, 1.0
  %v1014 = vsub.f32 %v946, 1.0
  %v1015 = vsub.f32 %v948, 1.0
  %v1016 = vsub.f32 %v950, 1.0
  %v1017 = vsub.f32 %v952, 1.0
  %v1018 = vsub.f32 %v954, 1.0
  %v1019 = vsel %vm699, %v445, %v955
  %v1020 = vsel %vm700, %v448, %v956
  %v1021 = vsel %vm701, %v453, %v957
  %v1022 = vsel %vm702, %v456, %v958
  %v1023 = vsel %vm703, %v461, %v959
  %v1024 = vsel %vm704, %v464, %v960
  %v1025 = vsel %vm705, %v469, %v961
  %v1026 = vsel %vm706, %v472, %v962
  %v1027 = vsel %vm707, %v477, %v963
  %v1028 = vsel %vm708, %v480, %v964
  %v1029 = vsel %vm709, %v485, %v965
  %v1030 = vsel %vm710, %v488, %v966
  %v1031 = vsel %vm711, %v493, %v967
  %v1032 = vsel %vm712, %v496, %v968
  %v1033 = vsel %vm713, %v501, %v969
  %v1034 = vsel %vm714, %v504, %v970
  %v1035 = vsel %vm715, %v509, %v971
  %v1036 = vsel %vm716, %v512, %v972
  %v1037 = vsel %vm717, %v517, %v973
  %v1038 = vsel %vm718, %v520, %v974
  %v1039 = vsel %vm719, %v525, %v975
  %v1040 = vsel %vm720, %v528, %v976
  %v1041 = vsel %vm721, %v533, %v977
  %v1042 = vsel %vm722, %v536, %v978
  %v1043 = vsel %vm723, %v541, %v979
  %v1044 = vsel %vm724, %v544, %v980
  %v1045 = vsel %vm725, %v549, %v981
  %v1046 = vsel %vm726, %v552, %v982
  %v1047 = vsel %vm727, %v557, %v983
  %v1048 = vsel %vm728, %v560, %v984
  %v1049 = vsel %vm729, %v565, %v985
  %v1050 = vsel %vm730, %v568, %v986
  %v1051 = vsel %vm731, %v573, %v987
  %v1052 = vsel %vm732, %v576, %v988
  %v1053 = vsel %vm733, %v581, %v989
  %v1054 = vsel %vm734, %v584, %v990
  %v1055 = vsel %vm735, %v589, %v991
  %v1056 = vsel %vm736, %v592, %v992
  %v1057 = vsel %vm737, %v597, %v993
  %v1058 = vsel %vm738, %v600, %v994
  %v1059 = vsel %vm739, %v605, %v995
  %v1060 = vsel %vm740, %v608, %v996
  %v1061 = vsel %vm741, %v613, %v997
  %v1062 = vsel %vm742, %v616, %v998
  %v1063 = vsel %vm743, %v621, %v999
  %v1064 = vsel %vm744, %v624, %v1000
  %v1065 = vsel %vm745, %v629, %v1001
  %v1066 = vsel %vm746, %v632, %v1002
  %v1067 = vsel %vm747, %v637, %v1003
  %v1068 = vsel %vm748, %v640, %v1004
  %v1069 = vsel %vm749, %v645, %v1005
  %v1070 = vsel %vm750, %v648, %v1006
  %v1071 = vsel %vm751, %v653, %v1007
  %v1072 = vsel %vm752, %v656, %v1008
  %v1073 = vsel %vm753, %v661, %v1009
  %v1074 = vsel %vm754, %v664, %v1010
  %v1075 = vsel %vm755, %v669, %v1011
  %v1076 = vsel %vm756, %v672, %v1012
  %v1077 = vsel %vm757, %v677, %v1013
  %v1078 = vsel %vm758, %v680, %v1014
  %v1079 = vsel %vm759, %v685, %v1015
  %v1080 = vsel %vm760, %v688, %v1016
  %v1081 = vsel %vm761, %v693, %v1017
  %v1082 = vsel %vm762, %v696, %v1018
  %vm1131 = vcmask 1046528
  %v1132 = vrot.slane %v1019, 1
  %v1133 = vrot.slane %v1020, 1
  %v1134 = vsel %vm1131, %v1132, %v1133
  %v1135 = vrot.slane %v1021, 1
  %v1136 = vsel %vm1131, %v1133, %v1135
  %v1137 = vrot.slane %v1022, 1
  %v1138 = vsel %vm1131, %v1135, %v1137
  %v1139 = vrot.slane %v1023, 1
  %v1140 = vsel %vm1131, %v1137, %v1139
  %v1141 = vrot.slane %v1024, 1
  %v1142 = vsel %vm1131, %v1139, %v1141
  %v1143 = vrot.slane %v1027, 1
  %v1144 = vrot.slane %v1028, 1
  %v1145 = vsel %vm1131, %v1143, %v1144
  %v1146 = vrot.slane %v1029, 1
  %v1147 = vsel %vm1131, %v1144, %v1146
  %v1148 = vrot.slane %v1030, 1
  %v1149 = vsel %vm1131, %v1146, %v1148
  %v1150 = vrot.slane %v1031, 1
  %v1151 = vsel %vm1131, %v1148, %v1150
  %v1152 = vrot.slane %v1032, 1
  %v1153 = vsel %vm1131, %v1150, %v1152
  %v1154 = vrot.slane %v1035, 1
  %v1155 = vrot.slane %v1036, 1
  %v1156 = vsel %vm1131, %v1154, %v1155
  %v1157 = vrot.slane %v1037, 1
  %v1158 = vsel %vm1131, %v1155, %v1157
  %v1159 = vrot.slane %v1038, 1
  %v1160 = vsel %vm1131, %v1157, %v1159
  %v1161 = vrot.slane %v1039, 1
  %v1162 = vsel %vm1131, %v1159, %v1161
  %v1163 = vrot.slane %v1040, 1
  %v1164 = vsel %vm1131, %v1161, %v1163
  %v1165 = vrot.slane %v1043, 1
  %v1166 = vrot.slane %v1044, 1
  %v1167 = vsel %vm1131, %v1165, %v1166
  %v1168 = vrot.slane %v1045, 1
  %v1169 = vsel %vm1131, %v1166, %v1168
  %v1170 = vrot.slane %v1046, 1
  %v1171 = vsel %vm1131, %v1168, %v1170
  %v1172 = vrot.slane %v1047, 1
  %v1173 = vsel %vm1131, %v1170, %v1172
  %v1174 = vrot.slane %v1048, 1
  %v1175 = vsel %vm1131, %v1172, %v1174
  %v1176 = vrot.slane %v1051, 1
  %v1177 = vrot.slane %v1052, 1
  %v1178 = vsel %vm1131, %v1176, %v1177
  %v1179 = vrot.slane %v1053, 1
  %v1180 = vsel %vm1131, %v1177, %v1179
  %v1181 = vrot.slane %v1054, 1
  %v1182 = vsel %vm1131, %v1179, %v1181
  %v1183 = vrot.slane %v1055, 1
  %v1184 = vsel %vm1131, %v1181, %v1183
  %v1185 = vrot.slane %v1056, 1
  %v1186 = vsel %vm1131, %v1183, %v1185
  %v1187 = vrot.slane %v1059, 1
  %v1188 = vrot.slane %v1060, 1
  %v1189 = vsel %vm1131, %v1187, %v1188
  %v1190 = vrot.slane %v1061, 1
  %v1191 = vsel %vm1131, %v1188, %v1190
  %v1192 = vrot.slane %v1062, 1
  %v1193 = vsel %vm1131, %v1190, %v1192
  %v1194 = vrot.slane %v1063, 1
  %v1195 = vsel %vm1131, %v1192, %v1194
  %v1196 = vrot.slane %v1064, 1
  %v1197 = vsel %vm1131, %v1194, %v1196
  %v1198 = vrot.slane %v1067, 1
  %v1199 = vrot.slane %v1068, 1
  %v1200 = vsel %vm1131, %v1198, %v1199
  %v1201 = vrot.slane %v1069, 1
  %v1202 = vsel %vm1131, %v1199, %v1201
  %v1203 = vrot.slane %v1070, 1
  %v1204 = vsel %vm1131, %v1201, %v1203
  %v1205 = vrot.slane %v1071, 1
  %v1206 = vsel %vm1131, %v1203, %v1205
  %v1207 = vrot.slane %v1072, 1
  %v1208 = vsel %vm1131, %v1205, %v1207
  %v1209 = vrot.slane %v1075, 1
  %v1210 = vrot.slane %v1076, 1
  %v1211 = vsel %vm1131, %v1209, %v1210
  %v1212 = vrot.slane %v1077, 1
  %v1213 = vsel %vm1131, %v1210, %v1212
  %v1214 = vrot.slane %v1078, 1
  %v1215 = vsel %vm1131, %v1212, %v1214
  %v1216 = vrot.slane %v1079, 1
  %v1217 = vsel %vm1131, %v1214, %v1216
  %v1218 = vrot.slane %v1080, 1
  %v1219 = vsel %vm1131, %v1216, %v1218
  %1220 = vrot.lane.b32.xlu0 %v1134, 32
  %v1221 = vpop.permute.xlu0 %1220
  %1222 = vrot.lane.b32.xlu0 %v1136, 32
  %v1223 = vpop.permute.xlu0 %1222
  %1224 = vrot.lane.b32.xlu0 %v1138, 32
  %v1225 = vpop.permute.xlu0 %1224
  %1226 = vrot.lane.b32.xlu0 %v1140, 32
  %v1227 = vpop.permute.xlu0 %1226
  %1228 = vrot.lane.b32.xlu0 %v1142, 32
  %v1229 = vpop.permute.xlu0 %1228
  %1230 = vrot.lane.b32.xlu0 %v1145, 32
  %v1231 = vpop.permute.xlu0 %1230
  %1232 = vrot.lane.b32.xlu0 %v1147, 32
  %v1233 = vpop.permute.xlu0 %1232
  %1234 = vrot.lane.b32.xlu0 %v1149, 32
  %v1235 = vpop.permute.xlu0 %1234
  %1236 = vrot.lane.b32.xlu0 %v1151, 32
  %v1237 = vpop.permute.xlu0 %1236
  %1238 = vrot.lane.b32.xlu0 %v1153, 32
  %v1239 = vpop.permute.xlu0 %1238
  %1240 = vrot.lane.b32.xlu0 %v1156, 32
  %v1241 = vpop.permute.xlu0 %1240
  %1242 = vrot.lane.b32.xlu0 %v1158, 32
  %v1243 = vpop.permute.xlu0 %1242
  %1244 = vrot.lane.b32.xlu0 %v1160, 32
  %v1245 = vpop.permute.xlu0 %1244
  %1246 = vrot.lane.b32.xlu0 %v1162, 32
  %v1247 = vpop.permute.xlu0 %1246
  %1248 = vrot.lane.b32.xlu0 %v1164, 32
  %v1249 = vpop.permute.xlu0 %1248
  %1250 = vrot.lane.b32.xlu0 %v1167, 32
  %v1251 = vpop.permute.xlu0 %1250
  %1252 = vrot.lane.b32.xlu0 %v1169, 32
  %v1253 = vpop.permute.xlu0 %1252
  %1254 = vrot.lane.b32.xlu0 %v1171, 32
  %v1255 = vpop.permute.xlu0 %1254
  %1256 = vrot.lane.b32.xlu0 %v1173, 32
  %v1257 = vpop.permute.xlu0 %1256
  %1258 = vrot.lane.b32.xlu0 %v1175, 32
  %v1259 = vpop.permute.xlu0 %1258
  %1260 = vrot.lane.b32.xlu0 %v1178, 32
  %v1261 = vpop.permute.xlu0 %1260
  %1262 = vrot.lane.b32.xlu0 %v1180, 32
  %v1263 = vpop.permute.xlu0 %1262
  %1264 = vrot.lane.b32.xlu0 %v1182, 32
  %v1265 = vpop.permute.xlu0 %1264
  %1266 = vrot.lane.b32.xlu0 %v1184, 32
  %v1267 = vpop.permute.xlu0 %1266
  %1268 = vrot.lane.b32.xlu0 %v1186, 32
  %v1269 = vpop.permute.xlu0 %1268
  %1270 = vrot.lane.b32.xlu0 %v1189, 32
  %v1271 = vpop.permute.xlu0 %1270
  %1272 = vrot.lane.b32.xlu0 %v1191, 32
  %v1273 = vpop.permute.xlu0 %1272
  %1274 = vrot.lane.b32.xlu0 %v1193, 32
  %v1275 = vpop.permute.xlu0 %1274
  %1276 = vrot.lane.b32.xlu0 %v1195, 32
  %v1277 = vpop.permute.xlu0 %1276
  %1278 = vrot.lane.b32.xlu0 %v1197, 32
  %v1279 = vpop.permute.xlu0 %1278
  %1280 = vrot.lane.b32.xlu0 %v1200, 32
  %v1281 = vpop.permute.xlu0 %1280
  %1282 = vrot.lane.b32.xlu0 %v1202, 32
  %v1283 = vpop.permute.xlu0 %1282
  %1284 = vrot.lane.b32.xlu0 %v1204, 32
  %v1285 = vpop.permute.xlu0 %1284
  %1286 = vrot.lane.b32.xlu0 %v1206, 32
  %v1287 = vpop.permute.xlu0 %1286
  %1288 = vrot.lane.b32.xlu0 %v1208, 32
  %v1289 = vpop.permute.xlu0 %1288
  %1290 = vrot.lane.b32.xlu0 %v1211, 32
  %v1291 = vpop.permute.xlu0 %1290
  %1292 = vrot.lane.b32.xlu0 %v1213, 32
  %v1293 = vpop.permute.xlu0 %1292
  %1294 = vrot.lane.b32.xlu0 %v1215, 32
  %v1295 = vpop.permute.xlu0 %1294
  %1296 = vrot.lane.b32.xlu0 %v1217, 32
  %v1297 = vpop.permute.xlu0 %1296
  %1298 = vrot.lane.b32.xlu0 %v1219, 32
  %v1299 = vpop.permute.xlu0 %1298
  %vm1340 = vcmask 1045504
  %v1341 = vrot.slane %v1019, 2
  %v1342 = vrot.slane %v1020, 2
  %v1343 = vsel %vm1340, %v1341, %v1342
  %v1344 = vrot.slane %v1021, 2
  %v1345 = vsel %vm1340, %v1342, %v1344
  %v1346 = vrot.slane %v1022, 2
  %v1347 = vsel %vm1340, %v1344, %v1346
  %v1348 = vrot.slane %v1023, 2
  %v1349 = vsel %vm1340, %v1346, %v1348
  %v1350 = vrot.slane %v1024, 2
  %v1351 = vsel %vm1340, %v1348, %v1350
  %v1352 = vrot.slane %v1027, 2
  %v1353 = vrot.slane %v1028, 2
  %v1354 = vsel %vm1340, %v1352, %v1353
  %v1355 = vrot.slane %v1029, 2
  %v1356 = vsel %vm1340, %v1353, %v1355
  %v1357 = vrot.slane %v1030, 2
  %v1358 = vsel %vm1340, %v1355, %v1357
  %v1359 = vrot.slane %v1031, 2
  %v1360 = vsel %vm1340, %v1357, %v1359
  %v1361 = vrot.slane %v1032, 2
  %v1362 = vsel %vm1340, %v1359, %v1361
  %v1363 = vrot.slane %v1035, 2
  %v1364 = vrot.slane %v1036, 2
  %v1365 = vsel %vm1340, %v1363, %v1364
  %v1366 = vrot.slane %v1037, 2
  %v1367 = vsel %vm1340, %v1364, %v1366
  %v1368 = vrot.slane %v1038, 2
  %v1369 = vsel %vm1340, %v1366, %v1368
  %v1370 = vrot.slane %v1039, 2
  %v1371 = vsel %vm1340, %v1368, %v1370
  %v1372 = vrot.slane %v1040, 2
  %v1373 = vsel %vm1340, %v1370, %v1372
  %v1374 = vrot.slane %v1043, 2
  %v1375 = vrot.slane %v1044, 2
  %v1376 = vsel %vm1340, %v1374, %v1375
  %v1377 = vrot.slane %v1045, 2
  %v1378 = vsel %vm1340, %v1375, %v1377
  %v1379 = vrot.slane %v1046, 2
  %v1380 = vsel %vm1340, %v1377, %v1379
  %v1381 = vrot.slane %v1047, 2
  %v1382 = vsel %vm1340, %v1379, %v1381
  %v1383 = vrot.slane %v1048, 2
  %v1384 = vsel %vm1340, %v1381, %v1383
  %v1385 = vrot.slane %v1051, 2
  %v1386 = vrot.slane %v1052, 2
  %v1387 = vsel %vm1340, %v1385, %v1386
  %v1388 = vrot.slane %v1053, 2
  %v1389 = vsel %vm1340, %v1386, %v1388
  %v1390 = vrot.slane %v1054, 2
  %v1391 = vsel %vm1340, %v1388, %v1390
  %v1392 = vrot.slane %v1055, 2
  %v1393 = vsel %vm1340, %v1390, %v1392
  %v1394 = vrot.slane %v1056, 2
  %v1395 = vsel %vm1340, %v1392, %v1394
  %v1396 = vrot.slane %v1059, 2
  %v1397 = vrot.slane %v1060, 2
  %v1398 = vsel %vm1340, %v1396, %v1397
  %v1399 = vrot.slane %v1061, 2
  %v1400 = vsel %vm1340, %v1397, %v1399
  %v1401 = vrot.slane %v1062, 2
  %v1402 = vsel %vm1340, %v1399, %v1401
  %v1403 = vrot.slane %v1063, 2
  %v1404 = vsel %vm1340, %v1401, %v1403
  %v1405 = vrot.slane %v1064, 2
  %v1406 = vsel %vm1340, %v1403, %v1405
  %v1407 = vrot.slane %v1067, 2
  %v1408 = vrot.slane %v1068, 2
  %v1409 = vsel %vm1340, %v1407, %v1408
  %v1410 = vrot.slane %v1069, 2
  %v1411 = vsel %vm1340, %v1408, %v1410
  %v1412 = vrot.slane %v1070, 2
  %v1413 = vsel %vm1340, %v1410, %v1412
  %v1414 = vrot.slane %v1071, 2
  %v1415 = vsel %vm1340, %v1412, %v1414
  %v1416 = vrot.slane %v1072, 2
  %v1417 = vsel %vm1340, %v1414, %v1416
  %v1418 = vrot.slane %v1075, 2
  %v1419 = vrot.slane %v1076, 2
  %v1420 = vsel %vm1340, %v1418, %v1419
  %v1421 = vrot.slane %v1077, 2
  %v1422 = vsel %vm1340, %v1419, %v1421
  %v1423 = vrot.slane %v1078, 2
  %v1424 = vsel %vm1340, %v1421, %v1423
  %v1425 = vrot.slane %v1079, 2
  %v1426 = vsel %vm1340, %v1423, %v1425
  %v1427 = vrot.slane %v1080, 2
  %v1428 = vsel %vm1340, %v1425, %v1427
  %1429 = vrot.lane.b32.xlu0 %v1343, 64
  %v1430 = vpop.permute.xlu0 %1429
  %1431 = vrot.lane.b32.xlu0 %v1345, 64
  %v1432 = vpop.permute.xlu0 %1431
  %1433 = vrot.lane.b32.xlu0 %v1347, 64
  %v1434 = vpop.permute.xlu0 %1433
  %1435 = vrot.lane.b32.xlu0 %v1349, 64
  %v1436 = vpop.permute.xlu0 %1435
  %1437 = vrot.lane.b32.xlu0 %v1351, 64
  %v1438 = vpop.permute.xlu0 %1437
  %1439 = vrot.lane.b32.xlu0 %v1354, 64
  %v1440 = vpop.permute.xlu0 %1439
  %1441 = vrot.lane.b32.xlu0 %v1356, 64
  %v1442 = vpop.permute.xlu0 %1441
  %1443 = vrot.lane.b32.xlu0 %v1358, 64
  %v1444 = vpop.permute.xlu0 %1443
  %1445 = vrot.lane.b32.xlu0 %v1360, 64
  %v1446 = vpop.permute.xlu0 %1445
  %1447 = vrot.lane.b32.xlu0 %v1362, 64
  %v1448 = vpop.permute.xlu0 %1447
  %1449 = vrot.lane.b32.xlu0 %v1365, 64
  %v1450 = vpop.permute.xlu0 %1449
  %1451 = vrot.lane.b32.xlu0 %v1367, 64
  %v1452 = vpop.permute.xlu0 %1451
  %1453 = vrot.lane.b32.xlu0 %v1369, 64
  %v1454 = vpop.permute.xlu0 %1453
  %1455 = vrot.lane.b32.xlu0 %v1371, 64
  %v1456 = vpop.permute.xlu0 %1455
  %1457 = vrot.lane.b32.xlu0 %v1373, 64
  %v1458 = vpop.permute.xlu0 %1457
  %1459 = vrot.lane.b32.xlu0 %v1376, 64
  %v1460 = vpop.permute.xlu0 %1459
  %1461 = vrot.lane.b32.xlu0 %v1378, 64
  %v1462 = vpop.permute.xlu0 %1461
  %1463 = vrot.lane.b32.xlu0 %v1380, 64
  %v1464 = vpop.permute.xlu0 %1463
  %1465 = vrot.lane.b32.xlu0 %v1382, 64
  %v1466 = vpop.permute.xlu0 %1465
  %1467 = vrot.lane.b32.xlu0 %v1384, 64
  %v1468 = vpop.permute.xlu0 %1467
  %1469 = vrot.lane.b32.xlu0 %v1387, 64
  %v1470 = vpop.permute.xlu0 %1469
  %1471 = vrot.lane.b32.xlu0 %v1389, 64
  %v1472 = vpop.permute.xlu0 %1471
  %1473 = vrot.lane.b32.xlu0 %v1391, 64
  %v1474 = vpop.permute.xlu0 %1473
  %1475 = vrot.lane.b32.xlu0 %v1393, 64
  %v1476 = vpop.permute.xlu0 %1475
  %1477 = vrot.lane.b32.xlu0 %v1395, 64
  %v1478 = vpop.permute.xlu0 %1477
  %1479 = vrot.lane.b32.xlu0 %v1398, 64
  %v1480 = vpop.permute.xlu0 %1479
  %1481 = vrot.lane.b32.xlu0 %v1400, 64
  %v1482 = vpop.permute.xlu0 %1481
  %1483 = vrot.lane.b32.xlu0 %v1402, 64
  %v1484 = vpop.permute.xlu0 %1483
  %1485 = vrot.lane.b32.xlu0 %v1404, 64
  %v1486 = vpop.permute.xlu0 %1485
  %1487 = vrot.lane.b32.xlu0 %v1406, 64
  %v1488 = vpop.permute.xlu0 %1487
  %1489 = vrot.lane.b32.xlu0 %v1409, 64
  %v1490 = vpop.permute.xlu0 %1489
  %1491 = vrot.lane.b32.xlu0 %v1411, 64
  %v1492 = vpop.permute.xlu0 %1491
  %1493 = vrot.lane.b32.xlu0 %v1413, 64
  %v1494 = vpop.permute.xlu0 %1493
  %1495 = vrot.lane.b32.xlu0 %v1415, 64
  %v1496 = vpop.permute.xlu0 %1495
  %1497 = vrot.lane.b32.xlu0 %v1417, 64
  %v1498 = vpop.permute.xlu0 %1497
  %1499 = vrot.lane.b32.xlu0 %v1420, 64
  %v1500 = vpop.permute.xlu0 %1499
  %1501 = vrot.lane.b32.xlu0 %v1422, 64
  %v1502 = vpop.permute.xlu0 %1501
  %1503 = vrot.lane.b32.xlu0 %v1424, 64
  %v1504 = vpop.permute.xlu0 %1503
  %1505 = vrot.lane.b32.xlu0 %v1426, 64
  %v1506 = vpop.permute.xlu0 %1505
  %1507 = vrot.lane.b32.xlu0 %v1428, 64
  %v1508 = vpop.permute.xlu0 %1507
  %1549 = vrot.lane.b32.xlu0 %v1020, 96
  %v1550 = vpop.permute.xlu0 %1549
  %1551 = vrot.lane.b32.xlu0 %v1021, 96
  %v1552 = vpop.permute.xlu0 %1551
  %1553 = vrot.lane.b32.xlu0 %v1022, 96
  %v1554 = vpop.permute.xlu0 %1553
  %1555 = vrot.lane.b32.xlu0 %v1023, 96
  %v1556 = vpop.permute.xlu0 %1555
  %1557 = vrot.lane.b32.xlu0 %v1024, 96
  %v1558 = vpop.permute.xlu0 %1557
  %1559 = vrot.lane.b32.xlu0 %v1028, 96
  %v1560 = vpop.permute.xlu0 %1559
  %1561 = vrot.lane.b32.xlu0 %v1029, 96
  %v1562 = vpop.permute.xlu0 %1561
  %1563 = vrot.lane.b32.xlu0 %v1030, 96
  %v1564 = vpop.permute.xlu0 %1563
  %1565 = vrot.lane.b32.xlu0 %v1031, 96
  %v1566 = vpop.permute.xlu0 %1565
  %1567 = vrot.lane.b32.xlu0 %v1032, 96
  %v1568 = vpop.permute.xlu0 %1567
  %1569 = vrot.lane.b32.xlu0 %v1036, 96
  %v1570 = vpop.permute.xlu0 %1569
  %1571 = vrot.lane.b32.xlu0 %v1037, 96
  %v1572 = vpop.permute.xlu0 %1571
  %1573 = vrot.lane.b32.xlu0 %v1038, 96
  %v1574 = vpop.permute.xlu0 %1573
  %1575 = vrot.lane.b32.xlu0 %v1039, 96
  %v1576 = vpop.permute.xlu0 %1575
  %1577 = vrot.lane.b32.xlu0 %v1040, 96
  %v1578 = vpop.permute.xlu0 %1577
  %1579 = vrot.lane.b32.xlu0 %v1044, 96
  %v1580 = vpop.permute.xlu0 %1579
  %1581 = vrot.lane.b32.xlu0 %v1045, 96
  %v1582 = vpop.permute.xlu0 %1581
  %1583 = vrot.lane.b32.xlu0 %v1046, 96
  %v1584 = vpop.permute.xlu0 %1583
  %1585 = vrot.lane.b32.xlu0 %v1047, 96
  %v1586 = vpop.permute.xlu0 %1585
  %1587 = vrot.lane.b32.xlu0 %v1048, 96
  %v1588 = vpop.permute.xlu0 %1587
  %1589 = vrot.lane.b32.xlu0 %v1052, 96
  %v1590 = vpop.permute.xlu0 %1589
  %1591 = vrot.lane.b32.xlu0 %v1053, 96
  %v1592 = vpop.permute.xlu0 %1591
  %1593 = vrot.lane.b32.xlu0 %v1054, 96
  %v1594 = vpop.permute.xlu0 %1593
  %1595 = vrot.lane.b32.xlu0 %v1055, 96
  %v1596 = vpop.permute.xlu0 %1595
  %1597 = vrot.lane.b32.xlu0 %v1056, 96
  %v1598 = vpop.permute.xlu0 %1597
  %1599 = vrot.lane.b32.xlu0 %v1060, 96
  %v1600 = vpop.permute.xlu0 %1599
  %1601 = vrot.lane.b32.xlu0 %v1061, 96
  %v1602 = vpop.permute.xlu0 %1601
  %1603 = vrot.lane.b32.xlu0 %v1062, 96
  %v1604 = vpop.permute.xlu0 %1603
  %1605 = vrot.lane.b32.xlu0 %v1063, 96
  %v1606 = vpop.permute.xlu0 %1605
  %1607 = vrot.lane.b32.xlu0 %v1064, 96
  %v1608 = vpop.permute.xlu0 %1607
  %1609 = vrot.lane.b32.xlu0 %v1068, 96
  %v1610 = vpop.permute.xlu0 %1609
  %1611 = vrot.lane.b32.xlu0 %v1069, 96
  %v1612 = vpop.permute.xlu0 %1611
  %1613 = vrot.lane.b32.xlu0 %v1070, 96
  %v1614 = vpop.permute.xlu0 %1613
  %1615 = vrot.lane.b32.xlu0 %v1071, 96
  %v1616 = vpop.permute.xlu0 %1615
  %1617 = vrot.lane.b32.xlu0 %v1072, 96
  %v1618 = vpop.permute.xlu0 %1617
  %1619 = vrot.lane.b32.xlu0 %v1076, 96
  %v1620 = vpop.permute.xlu0 %1619
  %1621 = vrot.lane.b32.xlu0 %v1077, 96
  %v1622 = vpop.permute.xlu0 %1621
  %1623 = vrot.lane.b32.xlu0 %v1078, 96
  %v1624 = vpop.permute.xlu0 %1623
  %1625 = vrot.lane.b32.xlu0 %v1079, 96
  %v1626 = vpop.permute.xlu0 %1625
  %1627 = vrot.lane.b32.xlu0 %v1080, 96
  %v1628 = vpop.permute.xlu0 %1627
  %v1677 = vrot.slane %v1025, 1
  %v1678 = vsel %vm1131, %v1141, %v1677
  %v1679 = vrot.slane %v1033, 1
  %v1680 = vsel %vm1131, %v1152, %v1679
  %v1681 = vrot.slane %v1041, 1
  %v1682 = vsel %vm1131, %v1163, %v1681
  %v1683 = vrot.slane %v1049, 1
  %v1684 = vsel %vm1131, %v1174, %v1683
  %v1685 = vrot.slane %v1057, 1
  %v1686 = vsel %vm1131, %v1185, %v1685
  %v1687 = vrot.slane %v1065, 1
  %v1688 = vsel %vm1131, %v1196, %v1687
  %v1689 = vrot.slane %v1073, 1
  %v1690 = vsel %vm1131, %v1207, %v1689
  %v1691 = vrot.slane %v1081, 1
  %v1692 = vsel %vm1131, %v1218, %v1691
  %v1733 = vrot.slane %v1025, 2
  %v1734 = vsel %vm1340, %v1350, %v1733
  %v1735 = vrot.slane %v1033, 2
  %v1736 = vsel %vm1340, %v1361, %v1735
  %v1737 = vrot.slane %v1041, 2
  %v1738 = vsel %vm1340, %v1372, %v1737
  %v1739 = vrot.slane %v1049, 2
  %v1740 = vsel %vm1340, %v1383, %v1739
  %v1741 = vrot.slane %v1057, 2
  %v1742 = vsel %vm1340, %v1394, %v1741
  %v1743 = vrot.slane %v1065, 2
  %v1744 = vsel %vm1340, %v1405, %v1743
  %v1745 = vrot.slane %v1073, 2
  %v1746 = vsel %vm1340, %v1416, %v1745
  %v1747 = vrot.slane %v1081, 2
  %v1748 = vsel %vm1340, %v1427, %v1747
  %1749 = vrot.lane.b32.xlu0 %v1345, 32
  %v1750 = vpop.permute.xlu0 %1749
  %1751 = vrot.lane.b32.xlu0 %v1347, 32
  %v1752 = vpop.permute.xlu0 %1751
  %1753 = vrot.lane.b32.xlu0 %v1349, 32
  %v1754 = vpop.permute.xlu0 %1753
  %1755 = vrot.lane.b32.xlu0 %v1351, 32
  %v1756 = vpop.permute.xlu0 %1755
  %1757 = vrot.lane.b32.xlu0 %v1734, 32
  %v1758 = vpop.permute.xlu0 %1757
  %1759 = vrot.lane.b32.xlu0 %v1356, 32
  %v1760 = vpop.permute.xlu0 %1759
  %1761 = vrot.lane.b32.xlu0 %v1358, 32
  %v1762 = vpop.permute.xlu0 %1761
  %1763 = vrot.lane.b32.xlu0 %v1360, 32
  %v1764 = vpop.permute.xlu0 %1763
  %1765 = vrot.lane.b32.xlu0 %v1362, 32
  %v1766 = vpop.permute.xlu0 %1765
  %1767 = vrot.lane.b32.xlu0 %v1736, 32
  %v1768 = vpop.permute.xlu0 %1767
  %1769 = vrot.lane.b32.xlu0 %v1367, 32
  %v1770 = vpop.permute.xlu0 %1769
  %1771 = vrot.lane.b32.xlu0 %v1369, 32
  %v1772 = vpop.permute.xlu0 %1771
  %1773 = vrot.lane.b32.xlu0 %v1371, 32
  %v1774 = vpop.permute.xlu0 %1773
  %1775 = vrot.lane.b32.xlu0 %v1373, 32
  %v1776 = vpop.permute.xlu0 %1775
  %1777 = vrot.lane.b32.xlu0 %v1738, 32
  %v1778 = vpop.permute.xlu0 %1777
  %1779 = vrot.lane.b32.xlu0 %v1378, 32
  %v1780 = vpop.permute.xlu0 %1779
  %1781 = vrot.lane.b32.xlu0 %v1380, 32
  %v1782 = vpop.permute.xlu0 %1781
  %1783 = vrot.lane.b32.xlu0 %v1382, 32
  %v1784 = vpop.permute.xlu0 %1783
  %1785 = vrot.lane.b32.xlu0 %v1384, 32
  %v1786 = vpop.permute.xlu0 %1785
  %1787 = vrot.lane.b32.xlu0 %v1740, 32
  %v1788 = vpop.permute.xlu0 %1787
  %1789 = vrot.lane.b32.xlu0 %v1389, 32
  %v1790 = vpop.permute.xlu0 %1789
  %1791 = vrot.lane.b32.xlu0 %v1391, 32
  %v1792 = vpop.permute.xlu0 %1791
  %1793 = vrot.lane.b32.xlu0 %v1393, 32
  %v1794 = vpop.permute.xlu0 %1793
  %1795 = vrot.lane.b32.xlu0 %v1395, 32
  %v1796 = vpop.permute.xlu0 %1795
  %1797 = vrot.lane.b32.xlu0 %v1742, 32
  %v1798 = vpop.permute.xlu0 %1797
  %1799 = vrot.lane.b32.xlu0 %v1400, 32
  %v1800 = vpop.permute.xlu0 %1799
  %1801 = vrot.lane.b32.xlu0 %v1402, 32
  %v1802 = vpop.permute.xlu0 %1801
  %1803 = vrot.lane.b32.xlu0 %v1404, 32
  %v1804 = vpop.permute.xlu0 %1803
  %1805 = vrot.lane.b32.xlu0 %v1406, 32
  %v1806 = vpop.permute.xlu0 %1805
  %1807 = vrot.lane.b32.xlu0 %v1744, 32
  %v1808 = vpop.permute.xlu0 %1807
  %1809 = vrot.lane.b32.xlu0 %v1411, 32
  %v1810 = vpop.permute.xlu0 %1809
  %1811 = vrot.lane.b32.xlu0 %v1413, 32
  %v1812 = vpop.permute.xlu0 %1811
  %1813 = vrot.lane.b32.xlu0 %v1415, 32
  %v1814 = vpop.permute.xlu0 %1813
  %1815 = vrot.lane.b32.xlu0 %v1417, 32
  %v1816 = vpop.permute.xlu0 %1815
  %1817 = vrot.lane.b32.xlu0 %v1746, 32
  %v1818 = vpop.permute.xlu0 %1817
  %1819 = vrot.lane.b32.xlu0 %v1422, 32
  %v1820 = vpop.permute.xlu0 %1819
  %1821 = vrot.lane.b32.xlu0 %v1424, 32
  %v1822 = vpop.permute.xlu0 %1821
  %1823 = vrot.lane.b32.xlu0 %v1426, 32
  %v1824 = vpop.permute.xlu0 %1823
  %1825 = vrot.lane.b32.xlu0 %v1428, 32
  %v1826 = vpop.permute.xlu0 %1825
  %1827 = vrot.lane.b32.xlu0 %v1748, 32
  %v1828 = vpop.permute.xlu0 %1827
  %1869 = vrot.lane.b32.xlu0 %v1021, 64
  %v1870 = vpop.permute.xlu0 %1869
  %1871 = vrot.lane.b32.xlu0 %v1022, 64
  %v1872 = vpop.permute.xlu0 %1871
  %1873 = vrot.lane.b32.xlu0 %v1023, 64
  %v1874 = vpop.permute.xlu0 %1873
  %1875 = vrot.lane.b32.xlu0 %v1024, 64
  %v1876 = vpop.permute.xlu0 %1875
  %1877 = vrot.lane.b32.xlu0 %v1025, 64
  %v1878 = vpop.permute.xlu0 %1877
  %1879 = vrot.lane.b32.xlu0 %v1029, 64
  %v1880 = vpop.permute.xlu0 %1879
  %1881 = vrot.lane.b32.xlu0 %v1030, 64
  %v1882 = vpop.permute.xlu0 %1881
  %1883 = vrot.lane.b32.xlu0 %v1031, 64
  %v1884 = vpop.permute.xlu0 %1883
  %1885 = vrot.lane.b32.xlu0 %v1032, 64
  %v1886 = vpop.permute.xlu0 %1885
  %1887 = vrot.lane.b32.xlu0 %v1033, 64
  %v1888 = vpop.permute.xlu0 %1887
  %1889 = vrot.lane.b32.xlu0 %v1037, 64
  %v1890 = vpop.permute.xlu0 %1889
  %1891 = vrot.lane.b32.xlu0 %v1038, 64
  %v1892 = vpop.permute.xlu0 %1891
  %1893 = vrot.lane.b32.xlu0 %v1039, 64
  %v1894 = vpop.permute.xlu0 %1893
  %1895 = vrot.lane.b32.xlu0 %v1040, 64
  %v1896 = vpop.permute.xlu0 %1895
  %1897 = vrot.lane.b32.xlu0 %v1041, 64
  %v1898 = vpop.permute.xlu0 %1897
  %1899 = vrot.lane.b32.xlu0 %v1045, 64
  %v1900 = vpop.permute.xlu0 %1899
  %1901 = vrot.lane.b32.xlu0 %v1046, 64
  %v1902 = vpop.permute.xlu0 %1901
  %1903 = vrot.lane.b32.xlu0 %v1047, 64
  %v1904 = vpop.permute.xlu0 %1903
  %1905 = vrot.lane.b32.xlu0 %v1048, 64
  %v1906 = vpop.permute.xlu0 %1905
  %1907 = vrot.lane.b32.xlu0 %v1049, 64
  %v1908 = vpop.permute.xlu0 %1907
  %1909 = vrot.lane.b32.xlu0 %v1053, 64
  %v1910 = vpop.permute.xlu0 %1909
  %1911 = vrot.lane.b32.xlu0 %v1054, 64
  %v1912 = vpop.permute.xlu0 %1911
  %1913 = vrot.lane.b32.xlu0 %v1055, 64
  %v1914 = vpop.permute.xlu0 %1913
  %1915 = vrot.lane.b32.xlu0 %v1056, 64
  %v1916 = vpop.permute.xlu0 %1915
  %1917 = vrot.lane.b32.xlu0 %v1057, 64
  %v1918 = vpop.permute.xlu0 %1917
  %1919 = vrot.lane.b32.xlu0 %v1061, 64
  %v1920 = vpop.permute.xlu0 %1919
  %1921 = vrot.lane.b32.xlu0 %v1062, 64
  %v1922 = vpop.permute.xlu0 %1921
  %1923 = vrot.lane.b32.xlu0 %v1063, 64
  %v1924 = vpop.permute.xlu0 %1923
  %1925 = vrot.lane.b32.xlu0 %v1064, 64
  %v1926 = vpop.permute.xlu0 %1925
  %1927 = vrot.lane.b32.xlu0 %v1065, 64
  %v1928 = vpop.permute.xlu0 %1927
  %1929 = vrot.lane.b32.xlu0 %v1069, 64
  %v1930 = vpop.permute.xlu0 %1929
  %1931 = vrot.lane.b32.xlu0 %v1070, 64
  %v1932 = vpop.permute.xlu0 %1931
  %1933 = vrot.lane.b32.xlu0 %v1071, 64
  %v1934 = vpop.permute.xlu0 %1933
  %1935 = vrot.lane.b32.xlu0 %v1072, 64
  %v1936 = vpop.permute.xlu0 %1935
  %1937 = vrot.lane.b32.xlu0 %v1073, 64
  %v1938 = vpop.permute.xlu0 %1937
  %1939 = vrot.lane.b32.xlu0 %v1077, 64
  %v1940 = vpop.permute.xlu0 %1939
  %1941 = vrot.lane.b32.xlu0 %v1078, 64
  %v1942 = vpop.permute.xlu0 %1941
  %1943 = vrot.lane.b32.xlu0 %v1079, 64
  %v1944 = vpop.permute.xlu0 %1943
  %1945 = vrot.lane.b32.xlu0 %v1080, 64
  %v1946 = vpop.permute.xlu0 %1945
  %1947 = vrot.lane.b32.xlu0 %v1081, 64
  %v1948 = vpop.permute.xlu0 %1947
  %v1997 = vrot.slane %v1026, 1
  %v1998 = vsel %vm1131, %v1677, %v1997
  %v1999 = vrot.slane %v1034, 1
  %v2000 = vsel %vm1131, %v1679, %v1999
  %v2001 = vrot.slane %v1042, 1
  %v2002 = vsel %vm1131, %v1681, %v2001
  %v2003 = vrot.slane %v1050, 1
  %v2004 = vsel %vm1131, %v1683, %v2003
  %v2005 = vrot.slane %v1058, 1
  %v2006 = vsel %vm1131, %v1685, %v2005
  %v2007 = vrot.slane %v1066, 1
  %v2008 = vsel %vm1131, %v1687, %v2007
  %v2009 = vrot.slane %v1074, 1
  %v2010 = vsel %vm1131, %v1689, %v2009
  %v2011 = vrot.slane %v1082, 1
  %v2012 = vsel %vm1131, %v1691, %v2011
  %2013 = vrot.lane.b32.xlu0 %v1138, 96
  %v2014 = vpop.permute.xlu0 %2013
  %2015 = vrot.lane.b32.xlu0 %v1140, 96
  %v2016 = vpop.permute.xlu0 %2015
  %2017 = vrot.lane.b32.xlu0 %v1142, 96
  %v2018 = vpop.permute.xlu0 %2017
  %2019 = vrot.lane.b32.xlu0 %v1678, 96
  %v2020 = vpop.permute.xlu0 %2019
  %2021 = vrot.lane.b32.xlu0 %v1998, 96
  %v2022 = vpop.permute.xlu0 %2021
  %2023 = vrot.lane.b32.xlu0 %v1149, 96
  %v2024 = vpop.permute.xlu0 %2023
  %2025 = vrot.lane.b32.xlu0 %v1151, 96
  %v2026 = vpop.permute.xlu0 %2025
  %2027 = vrot.lane.b32.xlu0 %v1153, 96
  %v2028 = vpop.permute.xlu0 %2027
  %2029 = vrot.lane.b32.xlu0 %v1680, 96
  %v2030 = vpop.permute.xlu0 %2029
  %2031 = vrot.lane.b32.xlu0 %v2000, 96
  %v2032 = vpop.permute.xlu0 %2031
  %2033 = vrot.lane.b32.xlu0 %v1160, 96
  %v2034 = vpop.permute.xlu0 %2033
  %2035 = vrot.lane.b32.xlu0 %v1162, 96
  %v2036 = vpop.permute.xlu0 %2035
  %2037 = vrot.lane.b32.xlu0 %v1164, 96
  %v2038 = vpop.permute.xlu0 %2037
  %2039 = vrot.lane.b32.xlu0 %v1682, 96
  %v2040 = vpop.permute.xlu0 %2039
  %2041 = vrot.lane.b32.xlu0 %v2002, 96
  %v2042 = vpop.permute.xlu0 %2041
  %2043 = vrot.lane.b32.xlu0 %v1171, 96
  %v2044 = vpop.permute.xlu0 %2043
  %2045 = vrot.lane.b32.xlu0 %v1173, 96
  %v2046 = vpop.permute.xlu0 %2045
  %2047 = vrot.lane.b32.xlu0 %v1175, 96
  %v2048 = vpop.permute.xlu0 %2047
  %2049 = vrot.lane.b32.xlu0 %v1684, 96
  %v2050 = vpop.permute.xlu0 %2049
  %2051 = vrot.lane.b32.xlu0 %v2004, 96
  %v2052 = vpop.permute.xlu0 %2051
  %2053 = vrot.lane.b32.xlu0 %v1182, 96
  %v2054 = vpop.permute.xlu0 %2053
  %2055 = vrot.lane.b32.xlu0 %v1184, 96
  %v2056 = vpop.permute.xlu0 %2055
  %2057 = vrot.lane.b32.xlu0 %v1186, 96
  %v2058 = vpop.permute.xlu0 %2057
  %2059 = vrot.lane.b32.xlu0 %v1686, 96
  %v2060 = vpop.permute.xlu0 %2059
  %2061 = vrot.lane.b32.xlu0 %v2006, 96
  %v2062 = vpop.permute.xlu0 %2061
  %2063 = vrot.lane.b32.xlu0 %v1193, 96
  %v2064 = vpop.permute.xlu0 %2063
  %2065 = vrot.lane.b32.xlu0 %v1195, 96
  %v2066 = vpop.permute.xlu0 %2065
  %2067 = vrot.lane.b32.xlu0 %v1197, 96
  %v2068 = vpop.permute.xlu0 %2067
  %2069 = vrot.lane.b32.xlu0 %v1688, 96
  %v2070 = vpop.permute.xlu0 %2069
  %2071 = vrot.lane.b32.xlu0 %v2008, 96
  %v2072 = vpop.permute.xlu0 %2071
  %2073 = vrot.lane.b32.xlu0 %v1204, 96
  %v2074 = vpop.permute.xlu0 %2073
  %2075 = vrot.lane.b32.xlu0 %v1206, 96
  %v2076 = vpop.permute.xlu0 %2075
  %2077 = vrot.lane.b32.xlu0 %v1208, 96
  %v2078 = vpop.permute.xlu0 %2077
  %2079 = vrot.lane.b32.xlu0 %v1690, 96
  %v2080 = vpop.permute.xlu0 %2079
  %2081 = vrot.lane.b32.xlu0 %v2010, 96
  %v2082 = vpop.permute.xlu0 %2081
  %2083 = vrot.lane.b32.xlu0 %v1215, 96
  %v2084 = vpop.permute.xlu0 %2083
  %2085 = vrot.lane.b32.xlu0 %v1217, 96
  %v2086 = vpop.permute.xlu0 %2085
  %2087 = vrot.lane.b32.xlu0 %v1219, 96
  %v2088 = vpop.permute.xlu0 %2087
  %2089 = vrot.lane.b32.xlu0 %v1692, 96
  %v2090 = vpop.permute.xlu0 %2089
  %2091 = vrot.lane.b32.xlu0 %v2012, 96
  %v2092 = vpop.permute.xlu0 %2091
  %v2133 = vrot.slane %v1026, 2
  %v2134 = vsel %vm1340, %v1733, %v2133
  %v2135 = vrot.slane %v1034, 2
  %v2136 = vsel %vm1340, %v1735, %v2135
  %v2137 = vrot.slane %v1042, 2
  %v2138 = vsel %vm1340, %v1737, %v2137
  %v2139 = vrot.slane %v1050, 2
  %v2140 = vsel %vm1340, %v1739, %v2139
  %v2141 = vrot.slane %v1058, 2
  %v2142 = vsel %vm1340, %v1741, %v2141
  %v2143 = vrot.slane %v1066, 2
  %v2144 = vsel %vm1340, %v1743, %v2143
  %v2145 = vrot.slane %v1074, 2
  %v2146 = vsel %vm1340, %v1745, %v2145
  %v2147 = vrot.slane %v1082, 2
  %v2148 = vsel %vm1340, %v1747, %v2147
  %vm2189 = vcmask 261120
  %v2190 = vsel %vm2189, %v1019, %v1221
  %v2191 = vsel %vm2189, %v1020, %v1223
  %v2192 = vsel %vm2189, %v1021, %v1225
  %v2193 = vsel %vm2189, %v1022, %v1227
  %v2194 = vsel %vm2189, %v1023, %v1229
  %v2195 = vsel %vm2189, %v1027, %v1231
  %v2196 = vsel %vm2189, %v1028, %v1233
  %v2197 = vsel %vm2189, %v1029, %v1235
  %v2198 = vsel %vm2189, %v1030, %v1237
  %v2199 = vsel %vm2189, %v1031, %v1239
  %v2200 = vsel %vm2189, %v1035, %v1241
  %v2201 = vsel %vm2189, %v1036, %v1243
  %v2202 = vsel %vm2189, %v1037, %v1245
  %v2203 = vsel %vm2189, %v1038, %v1247
  %v2204 = vsel %vm2189, %v1039, %v1249
  %v2205 = vsel %vm2189, %v1043, %v1251
  %v2206 = vsel %vm2189, %v1044, %v1253
  %v2207 = vsel %vm2189, %v1045, %v1255
  %v2208 = vsel %vm2189, %v1046, %v1257
  %v2209 = vsel %vm2189, %v1047, %v1259
  %v2210 = vsel %vm2189, %v1051, %v1261
  %v2211 = vsel %vm2189, %v1052, %v1263
  %v2212 = vsel %vm2189, %v1053, %v1265
  %v2213 = vsel %vm2189, %v1054, %v1267
  %v2214 = vsel %vm2189, %v1055, %v1269
  %v2215 = vsel %vm2189, %v1059, %v1271
  %v2216 = vsel %vm2189, %v1060, %v1273
  %v2217 = vsel %vm2189, %v1061, %v1275
  %v2218 = vsel %vm2189, %v1062, %v1277
  %v2219 = vsel %vm2189, %v1063, %v1279
  %v2220 = vsel %vm2189, %v1067, %v1281
  %v2221 = vsel %vm2189, %v1068, %v1283
  %v2222 = vsel %vm2189, %v1069, %v1285
  %v2223 = vsel %vm2189, %v1070, %v1287
  %v2224 = vsel %vm2189, %v1071, %v1289
  %v2225 = vsel %vm2189, %v1075, %v1291
  %v2226 = vsel %vm2189, %v1076, %v1293
  %v2227 = vsel %vm2189, %v1077, %v1295
  %v2228 = vsel %vm2189, %v1078, %v1297
  %v2229 = vsel %vm2189, %v1079, %v1299
  %vm2230 = vcmask 523264
  %v2231 = vsel %vm2230, %v2190, %v1430
  %v2232 = vsel %vm2230, %v2191, %v1432
  %v2233 = vsel %vm2230, %v2192, %v1434
  %v2234 = vsel %vm2230, %v2193, %v1436
  %v2235 = vsel %vm2230, %v2194, %v1438
  %v2236 = vsel %vm2230, %v2195, %v1440
  %v2237 = vsel %vm2230, %v2196, %v1442
  %v2238 = vsel %vm2230, %v2197, %v1444
  %v2239 = vsel %vm2230, %v2198, %v1446
  %v2240 = vsel %vm2230, %v2199, %v1448
  %v2241 = vsel %vm2230, %v2200, %v1450
  %v2242 = vsel %vm2230, %v2201, %v1452
  %v2243 = vsel %vm2230, %v2202, %v1454
  %v2244 = vsel %vm2230, %v2203, %v1456
  %v2245 = vsel %vm2230, %v2204, %v1458
  %v2246 = vsel %vm2230, %v2205, %v1460
  %v2247 = vsel %vm2230, %v2206, %v1462
  %v2248 = vsel %vm2230, %v2207, %v1464
  %v2249 = vsel %vm2230, %v2208, %v1466
  %v2250 = vsel %vm2230, %v2209, %v1468
  %v2251 = vsel %vm2230, %v2210, %v1470
  %v2252 = vsel %vm2230, %v2211, %v1472
  %v2253 = vsel %vm2230, %v2212, %v1474
  %v2254 = vsel %vm2230, %v2213, %v1476
  %v2255 = vsel %vm2230, %v2214, %v1478
  %v2256 = vsel %vm2230, %v2215, %v1480
  %v2257 = vsel %vm2230, %v2216, %v1482
  %v2258 = vsel %vm2230, %v2217, %v1484
  %v2259 = vsel %vm2230, %v2218, %v1486
  %v2260 = vsel %vm2230, %v2219, %v1488
  %v2261 = vsel %vm2230, %v2220, %v1490
  %v2262 = vsel %vm2230, %v2221, %v1492
  %v2263 = vsel %vm2230, %v2222, %v1494
  %v2264 = vsel %vm2230, %v2223, %v1496
  %v2265 = vsel %vm2230, %v2224, %v1498
  %v2266 = vsel %vm2230, %v2225, %v1500
  %v2267 = vsel %vm2230, %v2226, %v1502
  %v2268 = vsel %vm2230, %v2227, %v1504
  %v2269 = vsel %vm2230, %v2228, %v1506
  %v2270 = vsel %vm2230, %v2229, %v1508
  %vm2271 = vcmask 785408
  %v2272 = vsel %vm2271, %v2231, %v1550
  %v2273 = vsel %vm2271, %v2232, %v1552
  %v2274 = vsel %vm2271, %v2233, %v1554
  %v2275 = vsel %vm2271, %v2234, %v1556
  %v2276 = vsel %vm2271, %v2235, %v1558
  %v2277 = vsel %vm2271, %v2236, %v1560
  %v2278 = vsel %vm2271, %v2237, %v1562
  %v2279 = vsel %vm2271, %v2238, %v1564
  %v2280 = vsel %vm2271, %v2239, %v1566
  %v2281 = vsel %vm2271, %v2240, %v1568
  %v2282 = vsel %vm2271, %v2241, %v1570
  %v2283 = vsel %vm2271, %v2242, %v1572
  %v2284 = vsel %vm2271, %v2243, %v1574
  %v2285 = vsel %vm2271, %v2244, %v1576
  %v2286 = vsel %vm2271, %v2245, %v1578
  %v2287 = vsel %vm2271, %v2246, %v1580
  %v2288 = vsel %vm2271, %v2247, %v1582
  %v2289 = vsel %vm2271, %v2248, %v1584
  %v2290 = vsel %vm2271, %v2249, %v1586
  %v2291 = vsel %vm2271, %v2250, %v1588
  %v2292 = vsel %vm2271, %v2251, %v1590
  %v2293 = vsel %vm2271, %v2252, %v1592
  %v2294 = vsel %vm2271, %v2253, %v1594
  %v2295 = vsel %vm2271, %v2254, %v1596
  %v2296 = vsel %vm2271, %v2255, %v1598
  %v2297 = vsel %vm2271, %v2256, %v1600
  %v2298 = vsel %vm2271, %v2257, %v1602
  %v2299 = vsel %vm2271, %v2258, %v1604
  %v2300 = vsel %vm2271, %v2259, %v1606
  %v2301 = vsel %vm2271, %v2260, %v1608
  %v2302 = vsel %vm2271, %v2261, %v1610
  %v2303 = vsel %vm2271, %v2262, %v1612
  %v2304 = vsel %vm2271, %v2263, %v1614
  %v2305 = vsel %vm2271, %v2264, %v1616
  %v2306 = vsel %vm2271, %v2265, %v1618
  %v2307 = vsel %vm2271, %v2266, %v1620
  %v2308 = vsel %vm2271, %v2267, %v1622
  %v2309 = vsel %vm2271, %v2268, %v1624
  %v2310 = vsel %vm2271, %v2269, %v1626
  %v2311 = vsel %vm2271, %v2270, %v1628
  %v2312 = vsel %vm2189, %v1136, %v1750
  %v2313 = vsel %vm2189, %v1138, %v1752
  %v2314 = vsel %vm2189, %v1140, %v1754
  %v2315 = vsel %vm2189, %v1142, %v1756
  %v2316 = vsel %vm2189, %v1678, %v1758
  %v2317 = vsel %vm2189, %v1147, %v1760
  %v2318 = vsel %vm2189, %v1149, %v1762
  %v2319 = vsel %vm2189, %v1151, %v1764
  %v2320 = vsel %vm2189, %v1153, %v1766
  %v2321 = vsel %vm2189, %v1680, %v1768
  %v2322 = vsel %vm2189, %v1158, %v1770
  %v2323 = vsel %vm2189, %v1160, %v1772
  %v2324 = vsel %vm2189, %v1162, %v1774
  %v2325 = vsel %vm2189, %v1164, %v1776
  %v2326 = vsel %vm2189, %v1682, %v1778
  %v2327 = vsel %vm2189, %v1169, %v1780
  %v2328 = vsel %vm2189, %v1171, %v1782
  %v2329 = vsel %vm2189, %v1173, %v1784
  %v2330 = vsel %vm2189, %v1175, %v1786
  %v2331 = vsel %vm2189, %v1684, %v1788
  %v2332 = vsel %vm2189, %v1180, %v1790
  %v2333 = vsel %vm2189, %v1182, %v1792
  %v2334 = vsel %vm2189, %v1184, %v1794
  %v2335 = vsel %vm2189, %v1186, %v1796
  %v2336 = vsel %vm2189, %v1686, %v1798
  %v2337 = vsel %vm2189, %v1191, %v1800
  %v2338 = vsel %vm2189, %v1193, %v1802
  %v2339 = vsel %vm2189, %v1195, %v1804
  %v2340 = vsel %vm2189, %v1197, %v1806
  %v2341 = vsel %vm2189, %v1688, %v1808
  %v2342 = vsel %vm2189, %v1202, %v1810
  %v2343 = vsel %vm2189, %v1204, %v1812
  %v2344 = vsel %vm2189, %v1206, %v1814
  %v2345 = vsel %vm2189, %v1208, %v1816
  %v2346 = vsel %vm2189, %v1690, %v1818
  %v2347 = vsel %vm2189, %v1213, %v1820
  %v2348 = vsel %vm2189, %v1215, %v1822
  %v2349 = vsel %vm2189, %v1217, %v1824
  %v2350 = vsel %vm2189, %v1219, %v1826
  %v2351 = vsel %vm2189, %v1692, %v1828
  %v2352 = vsel %vm2230, %v2312, %v1870
  %v2353 = vsel %vm2230, %v2313, %v1872
  %v2354 = vsel %vm2230, %v2314, %v1874
  %v2355 = vsel %vm2230, %v2315, %v1876
  %v2356 = vsel %vm2230, %v2316, %v1878
  %v2357 = vsel %vm2230, %v2317, %v1880
  %v2358 = vsel %vm2230, %v2318, %v1882
  %v2359 = vsel %vm2230, %v2319, %v1884
  %v2360 = vsel %vm2230, %v2320, %v1886
  %v2361 = vsel %vm2230, %v2321, %v1888
  %v2362 = vsel %vm2230, %v2322, %v1890
  %v2363 = vsel %vm2230, %v2323, %v1892
  %v2364 = vsel %vm2230, %v2324, %v1894
  %v2365 = vsel %vm2230, %v2325, %v1896
  %v2366 = vsel %vm2230, %v2326, %v1898
  %v2367 = vsel %vm2230, %v2327, %v1900
  %v2368 = vsel %vm2230, %v2328, %v1902
  %v2369 = vsel %vm2230, %v2329, %v1904
  %v2370 = vsel %vm2230, %v2330, %v1906
  %v2371 = vsel %vm2230, %v2331, %v1908
  %v2372 = vsel %vm2230, %v2332, %v1910
  %v2373 = vsel %vm2230, %v2333, %v1912
  %v2374 = vsel %vm2230, %v2334, %v1914
  %v2375 = vsel %vm2230, %v2335, %v1916
  %v2376 = vsel %vm2230, %v2336, %v1918
  %v2377 = vsel %vm2230, %v2337, %v1920
  %v2378 = vsel %vm2230, %v2338, %v1922
  %v2379 = vsel %vm2230, %v2339, %v1924
  %v2380 = vsel %vm2230, %v2340, %v1926
  %v2381 = vsel %vm2230, %v2341, %v1928
  %v2382 = vsel %vm2230, %v2342, %v1930
  %v2383 = vsel %vm2230, %v2343, %v1932
  %v2384 = vsel %vm2230, %v2344, %v1934
  %v2385 = vsel %vm2230, %v2345, %v1936
  %v2386 = vsel %vm2230, %v2346, %v1938
  %v2387 = vsel %vm2230, %v2347, %v1940
  %v2388 = vsel %vm2230, %v2348, %v1942
  %v2389 = vsel %vm2230, %v2349, %v1944
  %v2390 = vsel %vm2230, %v2350, %v1946
  %v2391 = vsel %vm2230, %v2351, %v1948
  %v2392 = vsel %vm2271, %v2352, %v2014
  %v2393 = vsel %vm2271, %v2353, %v2016
  %v2394 = vsel %vm2271, %v2354, %v2018
  %v2395 = vsel %vm2271, %v2355, %v2020
  %v2396 = vsel %vm2271, %v2356, %v2022
  %v2397 = vsel %vm2271, %v2357, %v2024
  %v2398 = vsel %vm2271, %v2358, %v2026
  %v2399 = vsel %vm2271, %v2359, %v2028
  %v2400 = vsel %vm2271, %v2360, %v2030
  %v2401 = vsel %vm2271, %v2361, %v2032
  %v2402 = vsel %vm2271, %v2362, %v2034
  %v2403 = vsel %vm2271, %v2363, %v2036
  %v2404 = vsel %vm2271, %v2364, %v2038
  %v2405 = vsel %vm2271, %v2365, %v2040
  %v2406 = vsel %vm2271, %v2366, %v2042
  %v2407 = vsel %vm2271, %v2367, %v2044
  %v2408 = vsel %vm2271, %v2368, %v2046
  %v2409 = vsel %vm2271, %v2369, %v2048
  %v2410 = vsel %vm2271, %v2370, %v2050
  %v2411 = vsel %vm2271, %v2371, %v2052
  %v2412 = vsel %vm2271, %v2372, %v2054
  %v2413 = vsel %vm2271, %v2373, %v2056
  %v2414 = vsel %vm2271, %v2374, %v2058
  %v2415 = vsel %vm2271, %v2375, %v2060
  %v2416 = vsel %vm2271, %v2376, %v2062
  %v2417 = vsel %vm2271, %v2377, %v2064
  %v2418 = vsel %vm2271, %v2378, %v2066
  %v2419 = vsel %vm2271, %v2379, %v2068
  %v2420 = vsel %vm2271, %v2380, %v2070
  %v2421 = vsel %vm2271, %v2381, %v2072
  %v2422 = vsel %vm2271, %v2382, %v2074
  %v2423 = vsel %vm2271, %v2383, %v2076
  %v2424 = vsel %vm2271, %v2384, %v2078
  %v2425 = vsel %vm2271, %v2385, %v2080
  %v2426 = vsel %vm2271, %v2386, %v2082
  %v2427 = vsel %vm2271, %v2387, %v2084
  %v2428 = vsel %vm2271, %v2388, %v2086
  %v2429 = vsel %vm2271, %v2389, %v2088
  %v2430 = vsel %vm2271, %v2390, %v2090
  %v2431 = vsel %vm2271, %v2391, %v2092
  %v2432 = vpack.c.bf16 %v2273, %v2272
  %v2433 = vpack.c.bf16 %v2393, %v2392
  %v2434 = vpack.c.bf16 %v1349, %v1347
  %v2435 = vpack.c.bf16 %v2275, %v2274
  %v2436 = vpack.c.bf16 %v2395, %v2394
  %v2437 = vpack.c.bf16 %v1734, %v1351
  %v2438 = vpack.c.bf16 %v2277, %v2276
  %v2439 = vpack.c.bf16 %v2397, %v2396
  %v2440 = vpack.c.bf16 %v1358, %v2134
  %v2441 = vpack.c.bf16 %v2279, %v2278
  %v2442 = vpack.c.bf16 %v2399, %v2398
  %v2443 = vpack.c.bf16 %v1362, %v1360
  %v2444 = vpack.c.bf16 %v2281, %v2280
  %v2445 = vpack.c.bf16 %v2401, %v2400
  %v2446 = vpack.c.bf16 %v2136, %v1736
  %v2447 = vpack.c.bf16 %v2283, %v2282
  %v2448 = vpack.c.bf16 %v2403, %v2402
  %v2449 = vpack.c.bf16 %v1371, %v1369
  %v2450 = vpack.c.bf16 %v2285, %v2284
  %v2451 = vpack.c.bf16 %v2405, %v2404
  %v2452 = vpack.c.bf16 %v1738, %v1373
  %v2453 = vpack.c.bf16 %v2287, %v2286
  %v2454 = vpack.c.bf16 %v2407, %v2406
  %v2455 = vpack.c.bf16 %v1380, %v2138
  %v2456 = vpack.c.bf16 %v2289, %v2288
  %v2457 = vpack.c.bf16 %v2409, %v2408
  %v2458 = vpack.c.bf16 %v1384, %v1382
  %v2459 = vpack.c.bf16 %v2291, %v2290
  %v2460 = vpack.c.bf16 %v2411, %v2410
  %v2461 = vpack.c.bf16 %v2140, %v1740
  %v2462 = vpack.c.bf16 %v2293, %v2292
  %v2463 = vpack.c.bf16 %v2413, %v2412
  %v2464 = vpack.c.bf16 %v1393, %v1391
  %v2465 = vpack.c.bf16 %v2295, %v2294
  %v2466 = vpack.c.bf16 %v2415, %v2414
  %v2467 = vpack.c.bf16 %v1742, %v1395
  %v2468 = vpack.c.bf16 %v2297, %v2296
  %v2469 = vpack.c.bf16 %v2417, %v2416
  %v2470 = vpack.c.bf16 %v1402, %v2142
  %v2471 = vpack.c.bf16 %v2299, %v2298
  %v2472 = vpack.c.bf16 %v2419, %v2418
  %v2473 = vpack.c.bf16 %v1406, %v1404
  %v2474 = vpack.c.bf16 %v2301, %v2300
  %v2475 = vpack.c.bf16 %v2421, %v2420
  %v2476 = vpack.c.bf16 %v2144, %v1744
  %v2477 = vpack.c.bf16 %v2303, %v2302
  %v2478 = vpack.c.bf16 %v2423, %v2422
  %v2479 = vpack.c.bf16 %v1415, %v1413
  %v2480 = vpack.c.bf16 %v2305, %v2304
  %v2481 = vpack.c.bf16 %v2425, %v2424
  %v2482 = vpack.c.bf16 %v1746, %v1417
  %v2483 = vpack.c.bf16 %v2307, %v2306
  %v2484 = vpack.c.bf16 %v2427, %v2426
  %v2485 = vpack.c.bf16 %v1424, %v2146
  %v2486 = vpack.c.bf16 %v2309, %v2308
  %v2487 = vpack.c.bf16 %v2429, %v2428
  %v2488 = vpack.c.bf16 %v1428, %v1426
  %v2489 = vpack.c.bf16 %v2311, %v2310
  %v2490 = vpack.c.bf16 %v2431, %v2430
  %v2491 = vpack.c.bf16 %v2148, %v1748
  %v2493 = vlaneseq
  %v2494 = vshrl.u32 %v2493, 7
  %v2495 = vsub.s32 0, %v2494
  %v2496 = vrot.slane %v63, %v2495
  %v2534 = vunpack.c.l.b16 %v26
  %v2535 = vunpack.c.l.b16 %v27
  %v2536 = vunpack.c.l.b16 %v28
  %v2537 = vunpack.c.l.b16 %v29
  %v2538 = vunpack.c.l.b16 %v30
  %v2539 = vunpack.c.l.b16 %v31
  %v2540 = vunpack.c.l.b16 %v32
  %v2541 = vunpack.c.l.b16 %v33
  %v2542 = vunpack.c.l.b16 %v34
  %v2543 = vunpack.c.l.b16 %v35
  %v2544 = vunpack.c.l.b16 %v36
  %v2545 = vunpack.c.l.b16 %v37
  %v2546 = vunpack.c.l.b16 %v38
  %v2547 = vunpack.c.l.b16 %v39
  %v2548 = vunpack.c.l.b16 %v40
  %v2549 = vunpack.c.l.b16 %v41
  %v2550 = vunpack.c.l.b16 %v42
  %v2551 = vunpack.c.l.b16 %v43
  %v2552 = vunpack.c.l.b16 %v44
  %v2553 = vunpack.c.l.b16 %v45
  %v2554 = vunpack.c.l.b16 %v46
  %v2555 = vunpack.c.l.b16 %v47
  %v2556 = vunpack.c.l.b16 %v48
  %v2557 = vunpack.c.l.b16 %v49
  %v2558 = vunpack.c.l.b16 %v50
  %v2559 = vunpack.c.l.b16 %v51
  %v2560 = vunpack.c.l.b16 %v52
  %v2561 = vunpack.c.l.b16 %v53
  %v2562 = vunpack.c.l.b16 %v54
  %v2563 = vunpack.c.l.b16 %v55
  %v2564 = vunpack.c.l.b16 %v56
  %v2565 = vunpack.c.l.b16 %v57
  %v2566 = vunpack.c.l.b16 %v58
  %v2567 = vunpack.c.l.b16 %v59
  %v2568 = vunpack.c.l.b16 %v60
  %v2569 = vunpack.c.l.b16 %v61
  %v2570 = vpack.c.b16 %v2535, %v2534
  %v2571 = vpack.c.b16 %v2537, %v2536
  %v2572 = vpack.c.b16 %v2539, %v2538
  %v2573 = vpack.c.b16 %v2541, %v2540
  %v2574 = vpack.c.b16 %v2543, %v2542
  %v2575 = vpack.c.b16 %v2545, %v2544
  %v2576 = vpack.c.b16 %v2547, %v2546
  %v2577 = vpack.c.b16 %v2549, %v2548
  %v2578 = vpack.c.b16 %v2551, %v2550
  %v2579 = vpack.c.b16 %v2553, %v2552
  %v2580 = vpack.c.b16 %v2555, %v2554
  %v2581 = vpack.c.b16 %v2557, %v2556
  %v2582 = vpack.c.b16 %v2559, %v2558
  %v2583 = vpack.c.b16 %v2561, %v2560
  %v2584 = vpack.c.b16 %v2563, %v2562
  %v2585 = vpack.c.b16 %v2565, %v2564
  %v2586 = vpack.c.b16 %v2567, %v2566
  %v2587 = vpack.c.b16 %v2569, %v2568
  %v2607 = vsel %vm2189, %v2434, 0
  %v2610 = vsel %vm2189, %v2437, 0
  %v2613 = vsel %vm2189, %v2440, 0
  %v2616 = vsel %vm2189, %v2443, 0
  %v2619 = vsel %vm2189, %v2446, 0
  %v2622 = vsel %vm2189, %v2449, 0
  %v2625 = vsel %vm2189, %v2452, 0
  %v2628 = vsel %vm2189, %v2455, 0
  %v2631 = vsel %vm2189, %v2458, 0
  %v2634 = vsel %vm2189, %v2461, 0
  %v2637 = vsel %vm2189, %v2464, 0
  %v2640 = vsel %vm2189, %v2467, 0
  %v2643 = vsel %vm2189, %v2470, 0
  %v2646 = vsel %vm2189, %v2473, 0
  %v2649 = vsel %vm2189, %v2476, 0
  %v2652 = vsel %vm2189, %v2479, 0
  %v2655 = vsel %vm2189, %v2482, 0
  %v2658 = vsel %vm2189, %v2485, 0
  %v2661 = vsel %vm2189, %v2488, 0
  %v2664 = vsel %vm2189, %v2491, 0
  %2666 = vmatprep.subr.bf16.mxu0 0
  %2667 = vmatpush1.bf16.msra.mxu0 %v2570
  %2668 = vmatprep.subr.bf16.mxu0 0
  %2669 = vmatpush1.bf16.msra.mxu0 %v2571
  %2670 = vmatprep.subr.bf16.mxu0 0
  %2671 = vmatpush1.bf16.msra.mxu0 %v2572
  %2672 = vmatprep.subr.bf16.mxu0 0
  %2673 = vmatpush1.bf16.msra.mxu0 %v2573
  %2674 = vmatprep.subr.bf16.mxu0 0
  %2675 = vmatpush1.bf16.msra.mxu0 %v2574
  %2676 = vmatprep.subr.bf16.mxu0 0
  %2677 = vmatpush1.bf16.msra.mxu0 %v2575
  %2678 = vmatprep.subr.bf16.mxu0 0
  %2679 = vmatpush1.bf16.msra.mxu0 %v2576
  %2680 = vmatprep.subr.bf16.mxu0 0
  %2681 = vmatpush1.bf16.msra.mxu0 %v2577
  %2682 = vmatprep.subr.bf16.mxu0 0
  %2683 = vmatpush1.bf16.msra.mxu0 %v2578
  %2684 = vmatprep.subr.bf16.mxu0 0
  %2685 = vmatpush1.bf16.msra.mxu0 %v2579
  %2686 = vmatprep.subr.bf16.mxu0 0
  %2687 = vmatpush1.bf16.msra.mxu0 %v2580
  %2688 = vmatprep.subr.bf16.mxu0 0
  %2689 = vmatpush1.bf16.msra.mxu0 %v2581
  %2690 = vmatprep.subr.bf16.mxu0 0
  %2691 = vmatpush1.bf16.msra.mxu0 %v2582
  %2692 = vmatprep.subr.bf16.mxu0 0
  %2693 = vmatpush1.bf16.msra.mxu0 %v2583
  %2694 = vmatprep.subr.bf16.mxu0 0
  %2695 = vmatpush1.bf16.msra.mxu0 %v2584
  %2696 = vmatprep.subr.bf16.mxu0 0
  %2697 = vmatpush1.bf16.msra.mxu0 %v2585
  %2698 = vmatprep.mubr.bf16.mxu0 %v2433
  %2699 = vmatmul.mubr.bf16.gmra.mrb[0].mxu0 %v2432
  %v2700 = vpop.f32.mrb[0].mxu0
  %v2701 = vadd.f32 %v2496, %v2700
  %v2702 = vpop.f32.mrb[0].mxu0
  %v2703 = vpop.f32.mrb[0].mxu0
  %v2704 = vadd.f32 %v2496, %v2703
  %v2705 = vpop.f32.mrb[0].mxu0
  %2706 = vmatprep.mubr.bf16.mxu0 %v2436
  %2707 = vmatmul.mubr.bf16.gmra.mrb[0].mxu0 %v2435
  %v2708 = vpop.f32.mrb[0].mxu0
  %v2709 = vadd.f32 %v2496, %v2708
  %v2710 = vpop.f32.mrb[0].mxu0
  %v2711 = vpop.f32.mrb[0].mxu0
  %v2712 = vadd.f32 %v2496, %v2711
  %v2713 = vpop.f32.mrb[0].mxu0
  %2714 = vmatprep.mubr.bf16.mxu0 %v2439
  %2715 = vmatmul.mubr.bf16.gmra.mrb[0].mxu0 %v2438
  %v2716 = vpop.f32.mrb[0].mxu0
  %v2717 = vadd.f32 %v2496, %v2716
  %v2718 = vpop.f32.mrb[0].mxu0
  %v2719 = vpop.f32.mrb[0].mxu0
  %v2720 = vadd.f32 %v2496, %v2719
  %v2721 = vpop.f32.mrb[0].mxu0
  %2722 = vmatprep.mubr.bf16.mxu0 %v2442
  %2723 = vmatmul.mubr.bf16.gmra.mrb[0].mxu0 %v2441
  %v2724 = vpop.f32.mrb[0].mxu0
  %v2725 = vadd.f32 %v2496, %v2724
  %v2726 = vpop.f32.mrb[0].mxu0
  %v2727 = vpop.f32.mrb[0].mxu0
  %v2728 = vadd.f32 %v2496, %v2727
  %v2729 = vpop.f32.mrb[0].mxu0
  %2730 = vmatprep.mubr.bf16.mxu0 %v2445
  %2731 = vmatmul.mubr.bf16.gmra.mrb[0].mxu0 %v2444
  %v2732 = vpop.f32.mrb[0].mxu0
  %v2733 = vadd.f32 %v2496, %v2732
  %v2734 = vpop.f32.mrb[0].mxu0
  %v2735 = vpop.f32.mrb[0].mxu0
  %v2736 = vadd.f32 %v2496, %v2735
  %v2737 = vpop.f32.mrb[0].mxu0
  %2738 = vmatprep.mubr.bf16.mxu0 %v2448
  %2739 = vmatmul.mubr.bf16.gmra.mrb[0].mxu0 %v2447
  %v2740 = vpop.f32.mrb[0].mxu0
  %v2741 = vadd.f32 %v2496, %v2740
  %v2742 = vpop.f32.mrb[0].mxu0
  %v2743 = vpop.f32.mrb[0].mxu0
  %v2744 = vadd.f32 %v2496, %v2743
  %v2745 = vpop.f32.mrb[0].mxu0
  %2746 = vmatprep.mubr.bf16.mxu0 %v2451
  %2747 = vmatmul.mubr.bf16.gmra.mrb[0].mxu0 %v2450
  %v2748 = vpop.f32.mrb[0].mxu0
  %v2749 = vadd.f32 %v2496, %v2748
  %v2750 = vpop.f32.mrb[0].mxu0
  %v2751 = vpop.f32.mrb[0].mxu0
  %v2752 = vadd.f32 %v2496, %v2751
  %v2753 = vpop.f32.mrb[0].mxu0
  %2754 = vmatprep.mubr.bf16.mxu0 %v2454
  %2755 = vmatmul.mubr.bf16.gmra.mrb[0].mxu0 %v2453
  %v2756 = vpop.f32.mrb[0].mxu0
  %v2757 = vadd.f32 %v2496, %v2756
  %v2758 = vpop.f32.mrb[0].mxu0
  %v2759 = vpop.f32.mrb[0].mxu0
  %v2760 = vadd.f32 %v2496, %v2759
  %v2761 = vpop.f32.mrb[0].mxu0
  %2762 = vmatprep.mubr.bf16.mxu0 %v2457
  %2763 = vmatmul.mubr.bf16.gmra.mrb[0].mxu0 %v2456
  %v2764 = vpop.f32.mrb[0].mxu0
  %v2765 = vadd.f32 %v2496, %v2764
  %v2766 = vpop.f32.mrb[0].mxu0
  %v2767 = vpop.f32.mrb[0].mxu0
  %v2768 = vadd.f32 %v2496, %v2767
  %v2769 = vpop.f32.mrb[0].mxu0
  %2770 = vmatprep.mubr.bf16.mxu0 %v2460
  %2771 = vmatmul.mubr.bf16.gmra.mrb[0].mxu0 %v2459
  %v2772 = vpop.f32.mrb[0].mxu0
  %v2773 = vadd.f32 %v2496, %v2772
  %v2774 = vpop.f32.mrb[0].mxu0
  %v2775 = vpop.f32.mrb[0].mxu0
  %v2776 = vadd.f32 %v2496, %v2775
  %v2777 = vpop.f32.mrb[0].mxu0
  %2778 = vmatprep.mubr.bf16.mxu0 %v2463
  %2779 = vmatmul.mubr.bf16.gmra.mrb[0].mxu0 %v2462
  %v2780 = vpop.f32.mrb[0].mxu0
  %v2781 = vadd.f32 %v2496, %v2780
  %v2782 = vpop.f32.mrb[0].mxu0
  %v2783 = vpop.f32.mrb[0].mxu0
  %v2784 = vadd.f32 %v2496, %v2783
  %v2785 = vpop.f32.mrb[0].mxu0
  %2786 = vmatprep.mubr.bf16.mxu0 %v2466
  %2787 = vmatmul.mubr.bf16.gmra.mrb[0].mxu0 %v2465
  %v2788 = vpop.f32.mrb[0].mxu0
  %v2789 = vadd.f32 %v2496, %v2788
  %v2790 = vpop.f32.mrb[0].mxu0
  %v2791 = vpop.f32.mrb[0].mxu0
  %v2792 = vadd.f32 %v2496, %v2791
  %v2793 = vpop.f32.mrb[0].mxu0
  %2794 = vmatprep.mubr.bf16.mxu0 %v2469
  %2795 = vmatmul.mubr.bf16.gmra.mrb[0].mxu0 %v2468
  %v2796 = vpop.f32.mrb[0].mxu0
  %v2797 = vadd.f32 %v2496, %v2796
  %v2798 = vpop.f32.mrb[0].mxu0
  %v2799 = vpop.f32.mrb[0].mxu0
  %v2800 = vadd.f32 %v2496, %v2799
  %v2801 = vpop.f32.mrb[0].mxu0
  %2802 = vmatprep.mubr.bf16.mxu0 %v2472
  %2803 = vmatmul.mubr.bf16.gmra.mrb[0].mxu0 %v2471
  %v2804 = vpop.f32.mrb[0].mxu0
  %v2805 = vadd.f32 %v2496, %v2804
  %v2806 = vpop.f32.mrb[0].mxu0
  %v2807 = vpop.f32.mrb[0].mxu0
  %v2808 = vadd.f32 %v2496, %v2807
  %v2809 = vpop.f32.mrb[0].mxu0
  %2810 = vmatprep.mubr.bf16.mxu0 %v2475
  %2811 = vmatmul.mubr.bf16.gmra.mrb[0].mxu0 %v2474
  %v2812 = vpop.f32.mrb[0].mxu0
  %v2813 = vadd.f32 %v2496, %v2812
  %v2814 = vpop.f32.mrb[0].mxu0
  %v2815 = vpop.f32.mrb[0].mxu0
  %v2816 = vadd.f32 %v2496, %v2815
  %v2817 = vpop.f32.mrb[0].mxu0
  %2818 = vmatprep.mubr.bf16.mxu0 %v2478
  %2819 = vmatmul.mubr.bf16.gmra.mrb[0].mxu0 %v2477
  %v2820 = vpop.f32.mrb[0].mxu0
  %v2821 = vadd.f32 %v2496, %v2820
  %v2822 = vpop.f32.mrb[0].mxu0
  %v2823 = vpop.f32.mrb[0].mxu0
  %v2824 = vadd.f32 %v2496, %v2823
  %v2825 = vpop.f32.mrb[0].mxu0
  %2826 = vmatprep.mubr.bf16.mxu0 %v2481
  %2827 = vmatmul.mubr.bf16.gmra.mrb[0].mxu0 %v2480
  %v2828 = vpop.f32.mrb[0].mxu0
  %v2829 = vadd.f32 %v2496, %v2828
  %v2830 = vpop.f32.mrb[0].mxu0
  %v2831 = vpop.f32.mrb[0].mxu0
  %v2832 = vadd.f32 %v2496, %v2831
  %v2833 = vpop.f32.mrb[0].mxu0
  %2834 = vmatprep.mubr.bf16.mxu0 %v2484
  %2835 = vmatmul.mubr.bf16.gmra.mrb[0].mxu0 %v2483
  %v2836 = vpop.f32.mrb[0].mxu0
  %v2837 = vadd.f32 %v2496, %v2836
  %v2838 = vpop.f32.mrb[0].mxu0
  %v2839 = vpop.f32.mrb[0].mxu0
  %v2840 = vadd.f32 %v2496, %v2839
  %v2841 = vpop.f32.mrb[0].mxu0
  %2842 = vmatprep.mubr.bf16.mxu0 %v2487
  %2843 = vmatmul.mubr.bf16.gmra.mrb[0].mxu0 %v2486
  %v2844 = vpop.f32.mrb[0].mxu0
  %v2845 = vadd.f32 %v2496, %v2844
  %v2846 = vpop.f32.mrb[0].mxu0
  %v2847 = vpop.f32.mrb[0].mxu0
  %v2848 = vadd.f32 %v2496, %v2847
  %v2849 = vpop.f32.mrb[0].mxu0
  %2850 = vmatprep.mubr.bf16.mxu0 %v2490
  %2851 = vmatmul.mubr.bf16.gmra.mrb[0].mxu0 %v2489
  %v2852 = vpop.f32.mrb[0].mxu0
  %v2853 = vadd.f32 %v2496, %v2852
  %v2854 = vpop.f32.mrb[0].mxu0
  %v2855 = vpop.f32.mrb[0].mxu0
  %v2856 = vadd.f32 %v2496, %v2855
  %v2857 = vpop.f32.mrb[0].mxu0
  %2858 = vdwg.mxu0
  %2859 = vmatprep.subr.bf16.mxu0 0
  %2860 = vmatpush1.bf16.msra.mxu0 %v2586
  %2861 = vmatprep.subr.bf16.mxu0 0
  %2862 = vmatpush1.bf16.msra.mxu0 %v2587
  %2863 = vmatprep.subr.bf16.mxu0 0
  %2864 = vmatpush1.bf16.msra.mxu0 0
  %2865 = vmatprep.subr.bf16.mxu0 0
  %2866 = vmatpush1.bf16.msra.mxu0 0
  %2867 = vmatprep.subr.bf16.mxu0 0
  %2868 = vmatpush1.bf16.msra.mxu0 0
  %2869 = vmatprep.subr.bf16.mxu0 0
  %2870 = vmatpush1.bf16.msra.mxu0 0
  %2871 = vmatprep.subr.bf16.mxu0 0
  %2872 = vmatpush1.bf16.msra.mxu0 0
  %2873 = vmatprep.subr.bf16.mxu0 0
  %2874 = vmatpush1.bf16.msra.mxu0 0
  %2875 = vmatprep.subr.bf16.mxu0 0
  %2876 = vmatpush1.bf16.msra.mxu0 0
  %2877 = vmatprep.subr.bf16.mxu0 0
  %2878 = vmatpush1.bf16.msra.mxu0 0
  %2879 = vmatprep.subr.bf16.mxu0 0
  %2880 = vmatpush1.bf16.msra.mxu0 0
  %2881 = vmatprep.subr.bf16.mxu0 0
  %2882 = vmatpush1.bf16.msra.mxu0 0
  %2883 = vmatprep.subr.bf16.mxu0 0
  %2884 = vmatpush1.bf16.msra.mxu0 0
  %2885 = vmatprep.subr.bf16.mxu0 0
  %2886 = vmatpush1.bf16.msra.mxu0 0
  %2887 = vmatprep.subr.bf16.mxu0 0
  %2888 = vmatpush1.bf16.msra.mxu0 0
  %2889 = vmatprep.subr.bf16.mxu0 0
  %2890 = vmatpush1.bf16.msra.mxu0 0
  %2891 = vmatprep.mubr.bf16.mxu0 0
  %2892 = vmatmul.mubr.bf16.gmra.mrb[0].mxu0 %v2607
  %v2893 = vpop.f32.mrb[0].mxu0
  %v2894 = vadd.f32 %v2701, %v2893
  %v2895 = vpop.f32.mrb[0].mxu0
  %v2896 = vpop.f32.mrb[0].mxu0
  %v2897 = vadd.f32 %v2704, %v2896
  %v2898 = vpop.f32.mrb[0].mxu0
  %2899 = vmatprep.mubr.bf16.mxu0 0
  %2900 = vmatmul.mubr.bf16.gmra.mrb[0].mxu0 %v2610
  %v2901 = vpop.f32.mrb[0].mxu0
  %v2902 = vadd.f32 %v2709, %v2901
  %v2903 = vpop.f32.mrb[0].mxu0
  %v2904 = vpop.f32.mrb[0].mxu0
  %v2905 = vadd.f32 %v2712, %v2904
  %v2906 = vpop.f32.mrb[0].mxu0
  %2907 = vmatprep.mubr.bf16.mxu0 0
  %2908 = vmatmul.mubr.bf16.gmra.mrb[0].mxu0 %v2613
  %v2909 = vpop.f32.mrb[0].mxu0
  %v2910 = vadd.f32 %v2717, %v2909
  %v2911 = vpop.f32.mrb[0].mxu0
  %v2912 = vpop.f32.mrb[0].mxu0
  %v2913 = vadd.f32 %v2720, %v2912
  %v2914 = vpop.f32.mrb[0].mxu0
  %2915 = vmatprep.mubr.bf16.mxu0 0
  %2916 = vmatmul.mubr.bf16.gmra.mrb[0].mxu0 %v2616
  %v2917 = vpop.f32.mrb[0].mxu0
  %v2918 = vadd.f32 %v2725, %v2917
  %v2919 = vpop.f32.mrb[0].mxu0
  %v2920 = vpop.f32.mrb[0].mxu0
  %v2921 = vadd.f32 %v2728, %v2920
  %v2922 = vpop.f32.mrb[0].mxu0
  %2923 = vmatprep.mubr.bf16.mxu0 0
  %2924 = vmatmul.mubr.bf16.gmra.mrb[0].mxu0 %v2619
  %v2925 = vpop.f32.mrb[0].mxu0
  %v2926 = vadd.f32 %v2733, %v2925
  %v2927 = vpop.f32.mrb[0].mxu0
  %v2928 = vpop.f32.mrb[0].mxu0
  %v2929 = vadd.f32 %v2736, %v2928
  %v2930 = vpop.f32.mrb[0].mxu0
  %2931 = vmatprep.mubr.bf16.mxu0 0
  %2932 = vmatmul.mubr.bf16.gmra.mrb[0].mxu0 %v2622
  %v2933 = vpop.f32.mrb[0].mxu0
  %v2934 = vadd.f32 %v2741, %v2933
  %v2935 = vpop.f32.mrb[0].mxu0
  %v2936 = vpop.f32.mrb[0].mxu0
  %v2937 = vadd.f32 %v2744, %v2936
  %v2938 = vpop.f32.mrb[0].mxu0
  %2939 = vmatprep.mubr.bf16.mxu0 0
  %2940 = vmatmul.mubr.bf16.gmra.mrb[0].mxu0 %v2625
  %v2941 = vpop.f32.mrb[0].mxu0
  %v2942 = vadd.f32 %v2749, %v2941
  %v2943 = vpop.f32.mrb[0].mxu0
  %v2944 = vpop.f32.mrb[0].mxu0
  %v2945 = vadd.f32 %v2752, %v2944
  %v2946 = vpop.f32.mrb[0].mxu0
  %2947 = vmatprep.mubr.bf16.mxu0 0
  %2948 = vmatmul.mubr.bf16.gmra.mrb[0].mxu0 %v2628
  %v2949 = vpop.f32.mrb[0].mxu0
  %v2950 = vadd.f32 %v2757, %v2949
  %v2951 = vpop.f32.mrb[0].mxu0
  %v2952 = vpop.f32.mrb[0].mxu0
  %v2953 = vadd.f32 %v2760, %v2952
  %v2954 = vpop.f32.mrb[0].mxu0
  %2955 = vmatprep.mubr.bf16.mxu0 0
  %2956 = vmatmul.mubr.bf16.gmra.mrb[0].mxu0 %v2631
  %v2957 = vpop.f32.mrb[0].mxu0
  %v2958 = vadd.f32 %v2765, %v2957
  %v2959 = vpop.f32.mrb[0].mxu0
  %v2960 = vpop.f32.mrb[0].mxu0
  %v2961 = vadd.f32 %v2768, %v2960
  %v2962 = vpop.f32.mrb[0].mxu0
  %2963 = vmatprep.mubr.bf16.mxu0 0
  %2964 = vmatmul.mubr.bf16.gmra.mrb[0].mxu0 %v2634
  %v2965 = vpop.f32.mrb[0].mxu0
  %v2966 = vadd.f32 %v2773, %v2965
  %v2967 = vpop.f32.mrb[0].mxu0
  %v2968 = vpop.f32.mrb[0].mxu0
  %v2969 = vadd.f32 %v2776, %v2968
  %v2970 = vpop.f32.mrb[0].mxu0
  %2971 = vmatprep.mubr.bf16.mxu0 0
  %2972 = vmatmul.mubr.bf16.gmra.mrb[0].mxu0 %v2637
  %v2973 = vpop.f32.mrb[0].mxu0
  %v2974 = vadd.f32 %v2781, %v2973
  %v2975 = vpop.f32.mrb[0].mxu0
  %v2976 = vpop.f32.mrb[0].mxu0
  %v2977 = vadd.f32 %v2784, %v2976
  %v2978 = vpop.f32.mrb[0].mxu0
  %2979 = vmatprep.mubr.bf16.mxu0 0
  %2980 = vmatmul.mubr.bf16.gmra.mrb[0].mxu0 %v2640
  %v2981 = vpop.f32.mrb[0].mxu0
  %v2982 = vadd.f32 %v2789, %v2981
  %v2983 = vpop.f32.mrb[0].mxu0
  %v2984 = vpop.f32.mrb[0].mxu0
  %v2985 = vadd.f32 %v2792, %v2984
  %v2986 = vpop.f32.mrb[0].mxu0
  %2987 = vmatprep.mubr.bf16.mxu0 0
  %2988 = vmatmul.mubr.bf16.gmra.mrb[0].mxu0 %v2643
  %v2989 = vpop.f32.mrb[0].mxu0
  %v2990 = vadd.f32 %v2797, %v2989
  %v2991 = vpop.f32.mrb[0].mxu0
  %v2992 = vpop.f32.mrb[0].mxu0
  %v2993 = vadd.f32 %v2800, %v2992
  %v2994 = vpop.f32.mrb[0].mxu0
  %2995 = vmatprep.mubr.bf16.mxu0 0
  %2996 = vmatmul.mubr.bf16.gmra.mrb[0].mxu0 %v2646
  %v2997 = vpop.f32.mrb[0].mxu0
  %v2998 = vadd.f32 %v2805, %v2997
  %v2999 = vpop.f32.mrb[0].mxu0
  %v3000 = vpop.f32.mrb[0].mxu0
  %v3001 = vadd.f32 %v2808, %v3000
  %v3002 = vpop.f32.mrb[0].mxu0
  %3003 = vmatprep.mubr.bf16.mxu0 0
  %3004 = vmatmul.mubr.bf16.gmra.mrb[0].mxu0 %v2649
  %v3005 = vpop.f32.mrb[0].mxu0
  %v3006 = vadd.f32 %v2813, %v3005
  %v3007 = vpop.f32.mrb[0].mxu0
  %v3008 = vpop.f32.mrb[0].mxu0
  %v3009 = vadd.f32 %v2816, %v3008
  %v3010 = vpop.f32.mrb[0].mxu0
  %3011 = vmatprep.mubr.bf16.mxu0 0
  %3012 = vmatmul.mubr.bf16.gmra.mrb[0].mxu0 %v2652
  %v3013 = vpop.f32.mrb[0].mxu0
  %v3014 = vadd.f32 %v2821, %v3013
  %v3015 = vpop.f32.mrb[0].mxu0
  %v3016 = vpop.f32.mrb[0].mxu0
  %v3017 = vadd.f32 %v2824, %v3016
  %v3018 = vpop.f32.mrb[0].mxu0
  %3019 = vmatprep.mubr.bf16.mxu0 0
  %3020 = vmatmul.mubr.bf16.gmra.mrb[0].mxu0 %v2655
  %v3021 = vpop.f32.mrb[0].mxu0
  %v3022 = vadd.f32 %v2829, %v3021
  %v3023 = vpop.f32.mrb[0].mxu0
  %v3024 = vpop.f32.mrb[0].mxu0
  %v3025 = vadd.f32 %v2832, %v3024
  %v3026 = vpop.f32.mrb[0].mxu0
  %3027 = vmatprep.mubr.bf16.mxu0 0
  %3028 = vmatmul.mubr.bf16.gmra.mrb[0].mxu0 %v2658
  %v3029 = vpop.f32.mrb[0].mxu0
  %v3030 = vadd.f32 %v2837, %v3029
  %v3031 = vpop.f32.mrb[0].mxu0
  %v3032 = vpop.f32.mrb[0].mxu0
  %v3033 = vadd.f32 %v2840, %v3032
  %v3034 = vpop.f32.mrb[0].mxu0
  %3035 = vmatprep.mubr.bf16.mxu0 0
  %3036 = vmatmul.mubr.bf16.gmra.mrb[0].mxu0 %v2661
  %v3037 = vpop.f32.mrb[0].mxu0
  %v3038 = vadd.f32 %v2845, %v3037
  %v3039 = vpop.f32.mrb[0].mxu0
  %v3040 = vpop.f32.mrb[0].mxu0
  %v3041 = vadd.f32 %v2848, %v3040
  %v3042 = vpop.f32.mrb[0].mxu0
  %3043 = vmatprep.mubr.bf16.mxu0 0
  %3044 = vmatmul.mubr.bf16.gmra.mrb[0].mxu0 %v2664
  %v3045 = vpop.f32.mrb[0].mxu0
  %v3046 = vadd.f32 %v2853, %v3045
  %v3047 = vpop.f32.mrb[0].mxu0
  %v3048 = vpop.f32.mrb[0].mxu0
  %v3049 = vadd.f32 %v2856, %v3048
  %v3050 = vpop.f32.mrb[0].mxu0
  %3051 = vdwg.mxu0
  %vm3052 = vcmp.gt.f32.partialorder %v2894, 0.0
  %vm3053 = vcmp.gt.f32.partialorder %v2897, 0.0
  %vm3054 = vcmp.gt.f32.partialorder %v2902, 0.0
  %vm3055 = vcmp.gt.f32.partialorder %v2905, 0.0
  %vm3056 = vcmp.gt.f32.partialorder %v2910, 0.0
  %vm3057 = vcmp.gt.f32.partialorder %v2913, 0.0
  %vm3058 = vcmp.gt.f32.partialorder %v2918, 0.0
  %vm3059 = vcmp.gt.f32.partialorder %v2921, 0.0
  %vm3060 = vcmp.gt.f32.partialorder %v2926, 0.0
  %vm3061 = vcmp.gt.f32.partialorder %v2929, 0.0
  %vm3062 = vcmp.gt.f32.partialorder %v2934, 0.0
  %vm3063 = vcmp.gt.f32.partialorder %v2937, 0.0
  %vm3064 = vcmp.gt.f32.partialorder %v2942, 0.0
  %vm3065 = vcmp.gt.f32.partialorder %v2945, 0.0
  %vm3066 = vcmp.gt.f32.partialorder %v2950, 0.0
  %vm3067 = vcmp.gt.f32.partialorder %v2953, 0.0
  %vm3068 = vcmp.gt.f32.partialorder %v2958, 0.0
  %vm3069 = vcmp.gt.f32.partialorder %v2961, 0.0
  %vm3070 = vcmp.gt.f32.partialorder %v2966, 0.0
  %vm3071 = vcmp.gt.f32.partialorder %v2969, 0.0
  %vm3072 = vcmp.gt.f32.partialorder %v2974, 0.0
  %vm3073 = vcmp.gt.f32.partialorder %v2977, 0.0
  %vm3074 = vcmp.gt.f32.partialorder %v2982, 0.0
  %vm3075 = vcmp.gt.f32.partialorder %v2985, 0.0
  %vm3076 = vcmp.gt.f32.partialorder %v2990, 0.0
  %vm3077 = vcmp.gt.f32.partialorder %v2993, 0.0
  %vm3078 = vcmp.gt.f32.partialorder %v2998, 0.0
  %vm3079 = vcmp.gt.f32.partialorder %v3001, 0.0
  %vm3080 = vcmp.gt.f32.partialorder %v3006, 0.0
  %vm3081 = vcmp.gt.f32.partialorder %v3009, 0.0
  %vm3082 = vcmp.gt.f32.partialorder %v3014, 0.0
  %vm3083 = vcmp.gt.f32.partialorder %v3017, 0.0
  %vm3084 = vcmp.gt.f32.partialorder %v3022, 0.0
  %vm3085 = vcmp.gt.f32.partialorder %v3025, 0.0
  %vm3086 = vcmp.gt.f32.partialorder %v3030, 0.0
  %vm3087 = vcmp.gt.f32.partialorder %v3033, 0.0
  %vm3088 = vcmp.gt.f32.partialorder %v3038, 0.0
  %vm3089 = vcmp.gt.f32.partialorder %v3041, 0.0
  %vm3090 = vcmp.gt.f32.partialorder %v3046, 0.0
  %vm3091 = vcmp.gt.f32.partialorder %v3049, 0.0
  %v3092 = vmin.f32 %v2894, 0.0
  %v3093 = vmin.f32 %v2897, 0.0
  %v3094 = vmin.f32 %v2902, 0.0
  %v3095 = vmin.f32 %v2905, 0.0
  %v3096 = vmin.f32 %v2910, 0.0
  %v3097 = vmin.f32 %v2913, 0.0
  %v3098 = vmin.f32 %v2918, 0.0
  %v3099 = vmin.f32 %v2921, 0.0
  %v3100 = vmin.f32 %v2926, 0.0
  %v3101 = vmin.f32 %v2929, 0.0
  %v3102 = vmin.f32 %v2934, 0.0
  %v3103 = vmin.f32 %v2937, 0.0
  %v3104 = vmin.f32 %v2942, 0.0
  %v3105 = vmin.f32 %v2945, 0.0
  %v3106 = vmin.f32 %v2950, 0.0
  %v3107 = vmin.f32 %v2953, 0.0
  %v3108 = vmin.f32 %v2958, 0.0
  %v3109 = vmin.f32 %v2961, 0.0
  %v3110 = vmin.f32 %v2966, 0.0
  %v3111 = vmin.f32 %v2969, 0.0
  %v3112 = vmin.f32 %v2974, 0.0
  %v3113 = vmin.f32 %v2977, 0.0
  %v3114 = vmin.f32 %v2982, 0.0
  %v3115 = vmin.f32 %v2985, 0.0
  %v3116 = vmin.f32 %v2990, 0.0
  %v3117 = vmin.f32 %v2993, 0.0
  %v3118 = vmin.f32 %v2998, 0.0
  %v3119 = vmin.f32 %v3001, 0.0
  %v3120 = vmin.f32 %v3006, 0.0
  %v3121 = vmin.f32 %v3009, 0.0
  %v3122 = vmin.f32 %v3014, 0.0
  %v3123 = vmin.f32 %v3017, 0.0
  %v3124 = vmin.f32 %v3022, 0.0
  %v3125 = vmin.f32 %v3025, 0.0
  %v3126 = vmin.f32 %v3030, 0.0
  %v3127 = vmin.f32 %v3033, 0.0
  %v3128 = vmin.f32 %v3038, 0.0
  %v3129 = vmin.f32 %v3041, 0.0
  %v3130 = vmin.f32 %v3046, 0.0
  %v3131 = vmin.f32 %v3049, 0.0
  %v3132 = vmul.f32 %v3092, 1.442695
  %v3133 = vpow.pop %v3132
  %v3134 = vmul.f32 %v3093, 1.442695
  %v3135 = vpow.pop %v3134
  %v3136 = vmul.f32 %v3094, 1.442695
  %v3137 = vpow.pop %v3136
  %v3138 = vmul.f32 %v3095, 1.442695
  %v3139 = vpow.pop %v3138
  %v3140 = vmul.f32 %v3096, 1.442695
  %v3141 = vpow.pop %v3140
  %v3142 = vmul.f32 %v3097, 1.442695
  %v3143 = vpow.pop %v3142
  %v3144 = vmul.f32 %v3098, 1.442695
  %v3145 = vpow.pop %v3144
  %v3146 = vmul.f32 %v3099, 1.442695
  %v3147 = vpow.pop %v3146
  %v3148 = vmul.f32 %v3100, 1.442695
  %v3149 = vpow.pop %v3148
  %v3150 = vmul.f32 %v3101, 1.442695
  %v3151 = vpow.pop %v3150
  %v3152 = vmul.f32 %v3102, 1.442695
  %v3153 = vpow.pop %v3152
  %v3154 = vmul.f32 %v3103, 1.442695
  %v3155 = vpow.pop %v3154
  %v3156 = vmul.f32 %v3104, 1.442695
  %v3157 = vpow.pop %v3156
  %v3158 = vmul.f32 %v3105, 1.442695
  %v3159 = vpow.pop %v3158
  %v3160 = vmul.f32 %v3106, 1.442695
  %v3161 = vpow.pop %v3160
  %v3162 = vmul.f32 %v3107, 1.442695
  %v3163 = vpow.pop %v3162
  %v3164 = vmul.f32 %v3108, 1.442695
  %v3165 = vpow.pop %v3164
  %v3166 = vmul.f32 %v3109, 1.442695
  %v3167 = vpow.pop %v3166
  %v3168 = vmul.f32 %v3110, 1.442695
  %v3169 = vpow.pop %v3168
  %v3170 = vmul.f32 %v3111, 1.442695
  %v3171 = vpow.pop %v3170
  %v3172 = vmul.f32 %v3112, 1.442695
  %v3173 = vpow.pop %v3172
  %v3174 = vmul.f32 %v3113, 1.442695
  %v3175 = vpow.pop %v3174
  %v3176 = vmul.f32 %v3114, 1.442695
  %v3177 = vpow.pop %v3176
  %v3178 = vmul.f32 %v3115, 1.442695
  %v3179 = vpow.pop %v3178
  %v3180 = vmul.f32 %v3116, 1.442695
  %v3181 = vpow.pop %v3180
  %v3182 = vmul.f32 %v3117, 1.442695
  %v3183 = vpow.pop %v3182
  %v3184 = vmul.f32 %v3118, 1.442695
  %v3185 = vpow.pop %v3184
  %v3186 = vmul.f32 %v3119, 1.442695
  %v3187 = vpow.pop %v3186
  %v3188 = vmul.f32 %v3120, 1.442695
  %v3189 = vpow.pop %v3188
  %v3190 = vmul.f32 %v3121, 1.442695
  %v3191 = vpow.pop %v3190
  %v3192 = vmul.f32 %v3122, 1.442695
  %v3193 = vpow.pop %v3192
  %v3194 = vmul.f32 %v3123, 1.442695
  %v3195 = vpow.pop %v3194
  %v3196 = vmul.f32 %v3124, 1.442695
  %v3197 = vpow.pop %v3196
  %v3198 = vmul.f32 %v3125, 1.442695
  %v3199 = vpow.pop %v3198
  %v3200 = vmul.f32 %v3126, 1.442695
  %v3201 = vpow.pop %v3200
  %v3202 = vmul.f32 %v3127, 1.442695
  %v3203 = vpow.pop %v3202
  %v3204 = vmul.f32 %v3128, 1.442695
  %v3205 = vpow.pop %v3204
  %v3206 = vmul.f32 %v3129, 1.442695
  %v3207 = vpow.pop %v3206
  %v3208 = vmul.f32 %v3130, 1.442695
  %v3209 = vpow.pop %v3208
  %v3210 = vmul.f32 %v3131, 1.442695
  %v3211 = vpow.pop %v3210
  %v3212 = vsub.f32 %v3133, 1.0
  %v3213 = vsub.f32 %v3135, 1.0
  %v3214 = vsub.f32 %v3137, 1.0
  %v3215 = vsub.f32 %v3139, 1.0
  %v3216 = vsub.f32 %v3141, 1.0
  %v3217 = vsub.f32 %v3143, 1.0
  %v3218 = vsub.f32 %v3145, 1.0
  %v3219 = vsub.f32 %v3147, 1.0
  %v3220 = vsub.f32 %v3149, 1.0
  %v3221 = vsub.f32 %v3151, 1.0
  %v3222 = vsub.f32 %v3153, 1.0
  %v3223 = vsub.f32 %v3155, 1.0
  %v3224 = vsub.f32 %v3157, 1.0
  %v3225 = vsub.f32 %v3159, 1.0
  %v3226 = vsub.f32 %v3161, 1.0
  %v3227 = vsub.f32 %v3163, 1.0
  %v3228 = vsub.f32 %v3165, 1.0
  %v3229 = vsub.f32 %v3167, 1.0
  %v3230 = vsub.f32 %v3169, 1.0
  %v3231 = vsub.f32 %v3171, 1.0
  %v3232 = vsub.f32 %v3173, 1.0
  %v3233 = vsub.f32 %v3175, 1.0
  %v3234 = vsub.f32 %v3177, 1.0
  %v3235 = vsub.f32 %v3179, 1.0
  %v3236 = vsub.f32 %v3181, 1.0
  %v3237 = vsub.f32 %v3183, 1.0
  %v3238 = vsub.f32 %v3185, 1.0
  %v3239 = vsub.f32 %v3187, 1.0
  %v3240 = vsub.f32 %v3189, 1.0
  %v3241 = vsub.f32 %v3191, 1.0
  %v3242 = vsub.f32 %v3193, 1.0
  %v3243 = vsub.f32 %v3195, 1.0
  %v3244 = vsub.f32 %v3197, 1.0
  %v3245 = vsub.f32 %v3199, 1.0
  %v3246 = vsub.f32 %v3201, 1.0
  %v3247 = vsub.f32 %v3203, 1.0
  %v3248 = vsub.f32 %v3205, 1.0
  %v3249 = vsub.f32 %v3207, 1.0
  %v3250 = vsub.f32 %v3209, 1.0
  %v3251 = vsub.f32 %v3211, 1.0
  %v3252 = vsel %vm3052, %v2894, %v3212
  %v3253 = vsel %vm3053, %v2897, %v3213
  %v3254 = vsel %vm3054, %v2902, %v3214
  %v3255 = vsel %vm3055, %v2905, %v3215
  %v3256 = vsel %vm3056, %v2910, %v3216
  %v3257 = vsel %vm3057, %v2913, %v3217
  %v3258 = vsel %vm3058, %v2918, %v3218
  %v3259 = vsel %vm3059, %v2921, %v3219
  %v3260 = vsel %vm3060, %v2926, %v3220
  %v3261 = vsel %vm3061, %v2929, %v3221
  %v3262 = vsel %vm3062, %v2934, %v3222
  %v3263 = vsel %vm3063, %v2937, %v3223
  %v3264 = vsel %vm3064, %v2942, %v3224
  %v3265 = vsel %vm3065, %v2945, %v3225
  %v3266 = vsel %vm3066, %v2950, %v3226
  %v3267 = vsel %vm3067, %v2953, %v3227
  %v3268 = vsel %vm3068, %v2958, %v3228
  %v3269 = vsel %vm3069, %v2961, %v3229
  %v3270 = vsel %vm3070, %v2966, %v3230
  %v3271 = vsel %vm3071, %v2969, %v3231
  %v3272 = vsel %vm3072, %v2974, %v3232
  %v3273 = vsel %vm3073, %v2977, %v3233
  %v3274 = vsel %vm3074, %v2982, %v3234
  %v3275 = vsel %vm3075, %v2985, %v3235
  %v3276 = vsel %vm3076, %v2990, %v3236
  %v3277 = vsel %vm3077, %v2993, %v3237
  %v3278 = vsel %vm3078, %v2998, %v3238
  %v3279 = vsel %vm3079, %v3001, %v3239
  %v3280 = vsel %vm3080, %v3006, %v3240
  %v3281 = vsel %vm3081, %v3009, %v3241
  %v3282 = vsel %vm3082, %v3014, %v3242
  %v3283 = vsel %vm3083, %v3017, %v3243
  %v3284 = vsel %vm3084, %v3022, %v3244
  %v3285 = vsel %vm3085, %v3025, %v3245
  %v3286 = vsel %vm3086, %v3030, %v3246
  %v3287 = vsel %vm3087, %v3033, %v3247
  %v3288 = vsel %vm3088, %v3038, %v3248
  %v3289 = vsel %vm3089, %v3041, %v3249
  %v3290 = vsel %vm3090, %v3046, %v3250
  %v3291 = vsel %vm3091, %v3049, %v3251
  %3292 = vst.msk [vmem:[%s5] sm:$0xff] %vm2189, %v3252
  %3293 = vst.msk [vmem:[%s5 + $0x8] sm:$0xff] %vm2189, %v3253
  %3294 = vst.msk [vmem:[%s5 + $0x10] sm:$0xff] %vm2189, %v3254
  %3295 = vst.msk [vmem:[%s5 + $0x18] sm:$0xff] %vm2189, %v3255
  %3296 = vst.msk [vmem:[%s5 + $0x20] sm:$0xff] %vm2189, %v3256
  %3297 = vst.msk [vmem:[%s5 + $0x28] sm:$0xff] %vm2189, %v3257
  %3298 = vst.msk [vmem:[%s5 + $0x30] sm:$0xff] %vm2189, %v3258
  %3299 = vst.msk [vmem:[%s5 + $0x38] sm:$0xff] %vm2189, %v3259
  %3300 = vst.msk [vmem:[%s5 + $0x40] sm:$0xff] %vm2189, %v3260
  %3301 = vst.msk [vmem:[%s5 + $0x48] sm:$0xff] %vm2189, %v3261
  %3302 = vst.msk [vmem:[%s5 + $0x50] sm:$0xff] %vm2189, %v3262
  %3303 = vst.msk [vmem:[%s5 + $0x58] sm:$0xff] %vm2189, %v3263
  %3304 = vst.msk [vmem:[%s5 + $0x60] sm:$0xff] %vm2189, %v3264
  %3305 = vst.msk [vmem:[%s5 + $0x68] sm:$0xff] %vm2189, %v3265
  %3306 = vst.msk [vmem:[%s5 + $0x70] sm:$0xff] %vm2189, %v3266
  %3307 = vst.msk [vmem:[%s5 + $0x78] sm:$0xff] %vm2189, %v3267
  %3308 = vst.msk [vmem:[%s5 + $0x80] sm:$0xff] %vm2189, %v3268
  %3309 = vst.msk [vmem:[%s5 + $0x88] sm:$0xff] %vm2189, %v3269
  %3310 = vst.msk [vmem:[%s5 + $0x90] sm:$0xff] %vm2189, %v3270
  %3311 = vst.msk [vmem:[%s5 + $0x98] sm:$0xff] %vm2189, %v3271
  %3312 = vst.msk [vmem:[%s5 + $0xa0] sm:$0xff] %vm2189, %v3272
  %3313 = vst.msk [vmem:[%s5 + $0xa8] sm:$0xff] %vm2189, %v3273
  %3314 = vst.msk [vmem:[%s5 + $0xb0] sm:$0xff] %vm2189, %v3274
  %3315 = vst.msk [vmem:[%s5 + $0xb8] sm:$0xff] %vm2189, %v3275
  %3316 = vst.msk [vmem:[%s5 + $0xc0] sm:$0xff] %vm2189, %v3276
  %3317 = vst.msk [vmem:[%s5 + $0xc8] sm:$0xff] %vm2189, %v3277
  %3318 = vst.msk [vmem:[%s5 + $0xd0] sm:$0xff] %vm2189, %v3278
  %3319 = vst.msk [vmem:[%s5 + $0xd8] sm:$0xff] %vm2189, %v3279
  %3320 = vst.msk [vmem:[%s5 + $0xe0] sm:$0xff] %vm2189, %v3280
  %3321 = vst.msk [vmem:[%s5 + $0xe8] sm:$0xff] %vm2189, %v3281
  %3322 = vst.msk [vmem:[%s5 + $0xf0] sm:$0xff] %vm2189, %v3282
  %3323 = vst.msk [vmem:[%s5 + $0xf8] sm:$0xff] %vm2189, %v3283
  %3324 = vst.msk [vmem:[%s5 + $0x100] sm:$0xff] %vm2189, %v3284
  %3325 = vst.msk [vmem:[%s5 + $0x108] sm:$0xff] %vm2189, %v3285
  %3326 = vst.msk [vmem:[%s5 + $0x110] sm:$0xff] %vm2189, %v3286
  %3327 = vst.msk [vmem:[%s5 + $0x118] sm:$0xff] %vm2189, %v3287
  %3328 = vst.msk [vmem:[%s5 + $0x120] sm:$0xff] %vm2189, %v3288
  %3329 = vst.msk [vmem:[%s5 + $0x128] sm:$0xff] %vm2189, %v3289
  %3330 = vst.msk [vmem:[%s5 + $0x130] sm:$0xff] %vm2189, %v3290
  %3331 = vst.msk [vmem:[%s5 + $0x138] sm:$0xff] %vm2189, %v3291
  // Predicated region
  $region22: #{ddpg_conv_body_forward.1} parent=0 // pred_check
    _
  $region23: #{ddpg_conv_body_forward.1} parent=0 // pred_check_branch
    %3333 = sbr.rel (0) target = $region25
  $region24: #{ddpg_conv_body_forward.1} parent=0 // pred_region
    _
  $region25: #{ddpg_conv_body_forward.1} parent=0 // pred_fallthru
    _
  // Predicated region
  $region26: #{ddpg_conv_body_forward.1} parent=0 // pred_check
    _
  $region27: #{ddpg_conv_body_forward.1} parent=0 // pred_check_branch
    %3335 = sbr.rel (0) target = $region29
  $region28: #{ddpg_conv_body_forward.1} parent=0 // pred_region
    _
  $region29: #{ddpg_conv_body_forward.1} parent=0 // pred_fallthru
    _

</llo_original>
